<compile_context>
chip_gen: v5e
topology: v5e:2x2
jax: 0.10.0
libtpu: 0.0.40
codegen_flags: <defaults>
</compile_context>

<pallas_src>
import functools

import jax
import jax.numpy as jnp
from jax.experimental import pallas as pl
from jax.experimental.pallas import tpu as pltpu

GROUPS = 32
BASE_WIDTH = 4
EXPANSION = 4
CHUNK = 128          # output (and input) channels handled per grid step in the grouped conv
TAPS = 9             # 3x3
STEM_C = 128         # stem output padded to a lane-dense 128 channels
STAGE_STRIDES = (1, 2, 2, 2)
VMEM_LIMIT = 64 * 1024 * 1024


def _round_up(x, m):
    return (x + m - 1) // m * m


def _pad2(x, rows, cols):
    if rows == 0 and cols == 0:
        return x
    return jnp.pad(x, ((0, rows), (0, cols)))


# --------------------------------------------------------------------------
# Fused matmul (+BN scale/bias, +residual, +ReLU) Pallas kernels
# --------------------------------------------------------------------------

def _mm_epilogue(acc, s_ref, c_ref, r_ref, o_ref, relu):
    y = acc * s_ref[...] + c_ref[...]
    if r_ref is not None:
        y = y + r_ref[...].astype(jnp.float32)
    if relu:
        y = jnp.maximum(y, 0.0)
    o_ref[...] = y.astype(o_ref.dtype)


def _mm_kernel_single_k(a_ref, b_ref, s_ref, c_ref, o_ref, *, relu):
    acc = jnp.dot(a_ref[...], b_ref[...], preferred_element_type=jnp.float32)
    _mm_epilogue(acc, s_ref, c_ref, None, o_ref, relu)


def _mm_kernel_single_k_res(a_ref, b_ref, s_ref, c_ref, r_ref, o_ref, *, relu):
    acc = jnp.dot(a_ref[...], b_ref[...], preferred_element_type=jnp.float32)
    _mm_epilogue(acc, s_ref, c_ref, r_ref, o_ref, relu)


def _mm_kernel_multi_k(a_ref, b_ref, s_ref, c_ref, o_ref, acc_ref, *, relu):
    @pl.when(pl.program_id(2) == 0)
    def _():
        acc_ref[...] = jnp.zeros_like(acc_ref)

    acc_ref[...] += jnp.dot(a_ref[...], b_ref[...],
                            preferred_element_type=jnp.float32)

    @pl.when(pl.program_id(2) == pl.num_programs(2) - 1)
    def _():
        _mm_epilogue(acc_ref[...], s_ref, c_ref, None, o_ref, relu)


def _mm_kernel_multi_k_res(a_ref, b_ref, s_ref, c_ref, r_ref, o_ref, acc_ref, *, relu):
    @pl.when(pl.program_id(2) == 0)
    def _():
        acc_ref[...] = jnp.zeros_like(acc_ref)

    acc_ref[...] += jnp.dot(a_ref[...], b_ref[...],
                            preferred_element_type=jnp.float32)

    @pl.when(pl.program_id(2) == pl.num_programs(2) - 1)
    def _():
        _mm_epilogue(acc_ref[...], s_ref, c_ref, r_ref, o_ref, relu)


@functools.partial(jax.jit, static_argnames=("relu", "out_dtype"))
def fused_matmul(a, b, scale, bias, residual=None, *, relu=False,
                 out_dtype=jnp.bfloat16):
    """act((a @ b) * scale + bias [+ residual]); bf16 MXU inputs, f32 accumulate."""
    M, K = a.shape
    K2, N = b.shape
    assert K == K2
    TM = min(512, _round_up(M, 16))
    TN = min(512, _round_up(N, 128))
    if M <= 128:
        # tiny-M (FC head, late stages): single K pass, no scratch accumulator
        TK = _round_up(K, 128)
    else:
        TK = min(1024, _round_up(K, 128))
    Mp, Kp, Np = _round_up(M, TM), _round_up(K, TK), _round_up(N, TN)

    a_p = _pad2(a.astype(jnp.bfloat16), Mp - M, Kp - K)
    b_p = _pad2(b.astype(jnp.bfloat16), Kp - K, Np - N)
    s_p = _pad2(scale.reshape(1, N).astype(jnp.float32), 0, Np - N)
    c_p = _pad2(bias.reshape(1, N).astype(jnp.float32), 0, Np - N)

    nm, nn, nk = Mp // TM, Np // TN, Kp // TK
    has_res = residual is not None
    args = [a_p, b_p, s_p, c_p]
    if has_res:
        args.append(_pad2(residual.astype(jnp.bfloat16), Mp - M, Np - N))

    if nk == 1:
        in_specs = [pl.BlockSpec((TM, TK), lambda i, j: (i, 0)),
                    pl.BlockSpec((TK, TN), lambda i, j: (0, j)),
                    pl.BlockSpec((1, TN), lambda i, j: (0, j)),
                    pl.BlockSpec((1, TN), lambda i, j: (0, j))]
        if has_res:
            in_specs.append(pl.BlockSpec((TM, TN), lambda i, j: (i, j)))
        kernel = functools.partial(
            _mm_kernel_single_k_res if has_res else _mm_kernel_single_k, relu=relu)
        out = pl.pallas_call(
            kernel,
            out_shape=jax.ShapeDtypeStruct((Mp, Np), out_dtype),
            grid_spec=pltpu.PrefetchScalarGridSpec(
                num_scalar_prefetch=0,
                grid=(nm, nn),
                in_specs=in_specs,
                out_specs=pl.BlockSpec((TM, TN), lambda i, j: (i, j))),
            compiler_params=pltpu.CompilerParams(
                dimension_semantics=("parallel", "parallel"),
                vmem_limit_bytes=VMEM_LIMIT),
        )(*args)
    else:
        in_specs = [pl.BlockSpec((TM, TK), lambda i, j, k: (i, k)),
                    pl.BlockSpec((TK, TN), lambda i, j, k: (k, j)),
                    pl.BlockSpec((1, TN), lambda i, j, k: (0, j)),
                    pl.BlockSpec((1, TN), lambda i, j, k: (0, j))]
        if has_res:
            in_specs.append(pl.BlockSpec((TM, TN), lambda i, j, k: (i, j)))
        kernel = functools.partial(
            _mm_kernel_multi_k_res if has_res else _mm_kernel_multi_k, relu=relu)
        out = pl.pallas_call(
            kernel,
            out_shape=jax.ShapeDtypeStruct((Mp, Np), out_dtype),
            grid_spec=pltpu.PrefetchScalarGridSpec(
                num_scalar_prefetch=0,
                grid=(nm, nn, nk),
                in_specs=in_specs,
                out_specs=pl.BlockSpec((TM, TN), lambda i, j, k: (i, j)),
                scratch_shapes=[pltpu.VMEM((TM, TN), jnp.float32)]),
            compiler_params=pltpu.CompilerParams(
                dimension_semantics=("parallel", "parallel", "arbitrary"),
                vmem_limit_bytes=VMEM_LIMIT),
        )(*args)
    if Mp == M and Np == N:
        return out
    return out[:M, :N]


# --------------------------------------------------------------------------
# Grouped 3x3 conv: chunk-packed block-diagonal matmul, taps folded into K
# --------------------------------------------------------------------------

def _group_conv_kernel(a_ref, w_ref, s_ref, c_ref, o_ref, *, relu):
    # single MXU matmul, K = 9*128: the MXU accumulates over taps internally
    acc = jnp.dot(a_ref[...], w_ref[0], preferred_element_type=jnp.float32)
    y = acc * s_ref[...] + c_ref[...]
    if relu:
        y = jnp.maximum(y, 0.0)
    o_ref[...] = y.astype(o_ref.dtype)


@functools.partial(jax.jit, static_argnames=("relu",))
def chunked_group_matmul(a, wbd, scale, bias, *, relu=True):
    """a: (M, n_chunks*9*CHUNK) bf16, chunk-major / tap-major / channel-minor.
    wbd: (n_chunks, 9*CHUNK, CHUNK) block-diagonal weight (prepacked bf16).

    out[m, c*CHUNK:(c+1)*CHUNK] = act((a[m, c*1152:(c+1)*1152] @ wbd[c]) * scale + bias)
    """
    M, Ktot = a.shape
    n_chunks, Kc, Cc = wbd.shape
    assert Ktot == n_chunks * Kc and Cc == CHUNK
    Cout = n_chunks * Cc
    TM = min(512, _round_up(M, 16))
    Mp = _round_up(M, TM)

    a_p = _pad2(a.astype(jnp.bfloat16), Mp - M, 0)
    s_p = scale.reshape(1, Cout).astype(jnp.float32)
    c_p = bias.reshape(1, Cout).astype(jnp.float32)

    kernel = functools.partial(_group_conv_kernel, relu=relu)
    out = pl.pallas_call(
        kernel,
        out_shape=jax.ShapeDtypeStruct((Mp, Cout), jnp.bfloat16),
        grid_spec=pltpu.PrefetchScalarGridSpec(
            num_scalar_prefetch=0,
            grid=(Mp // TM, n_chunks),      # M outermost -> megacore splits rows
            in_specs=[pl.BlockSpec((TM, Kc), lambda m, c: (m, c)),
                      pl.BlockSpec((1, Kc, Cc), lambda m, c: (c, 0, 0)),
                      pl.BlockSpec((1, Cc), lambda m, c: (0, c)),
                      pl.BlockSpec((1, Cc), lambda m, c: (0, c))],
            out_specs=pl.BlockSpec((TM, Cc), lambda m, c: (m, c))),
        compiler_params=pltpu.CompilerParams(
            dimension_semantics=("parallel", "parallel"),
            vmem_limit_bytes=VMEM_LIMIT),
    )(a_p, wbd, s_p, c_p)
    if Mp == M:
        return out
    return out[:M]


# --------------------------------------------------------------------------
# Pooling kernels
# --------------------------------------------------------------------------

def _window_max_kernel(x_ref, o_ref):
    o_ref[...] = jnp.max(x_ref[...], axis=0)


@jax.jit
def pallas_window_max(stacked):
    """(KK, R, C) -> (R, C): max over the pooling-window axis, tiled over rows."""
    KK, R, C = stacked.shape
    TR = min(512, _round_up(R, 8))
    Rp = _round_up(R, TR)
    x_p = stacked if Rp == R else jnp.pad(stacked, ((0, 0), (0, Rp - R), (0, 0)))
    out = pl.pallas_call(
        _window_max_kernel,
        out_shape=jax.ShapeDtypeStruct((Rp, C), stacked.dtype),
        grid_spec=pltpu.PrefetchScalarGridSpec(
            num_scalar_prefetch=0,
            grid=(Rp // TR,),
            in_specs=[pl.BlockSpec((KK, TR, C), lambda i: (0, i, 0))],
            out_specs=pl.BlockSpec((TR, C), lambda i: (i, 0))),
        compiler_params=pltpu.CompilerParams(
            dimension_semantics=("parallel",),
            vmem_limit_bytes=VMEM_LIMIT),
    )(x_p)
    return out if Rp == R else out[:R]


def _avgpool_kernel(x_ref, o_ref):
    o_ref[...] = jnp.mean(x_ref[...].astype(jnp.float32), axis=1)


@jax.jit
def pallas_global_avgpool(x):
    """(N, HW, C) -> (N, C) float32, tiled over channels."""
    N, HW, C = x.shape
    TC = C if C <= 512 else 512
    assert C % TC == 0
    out = pl.pallas_call(
        _avgpool_kernel,
        out_shape=jax.ShapeDtypeStruct((N, C), jnp.float32),
        grid_spec=pltpu.PrefetchScalarGridSpec(
            num_scalar_prefetch=0,
            grid=(C // TC,),
            in_specs=[pl.BlockSpec((N, HW, TC), lambda j: (0, 0, j))],
            out_specs=pl.BlockSpec((N, TC), lambda j: (0, j))),
        compiler_params=pltpu.CompilerParams(
            dimension_semantics=("parallel",),
            vmem_limit_bytes=VMEM_LIMIT),
    )(x)
    return out


# --------------------------------------------------------------------------
# Plain-JAX glue (shifted windows / layout plumbing, activation side only)
# --------------------------------------------------------------------------

def _shifted_windows(x, kh, kw, stride, pad, fill=0.0):
    """Return the kh*kw shifted window views (each (N, Ho, Wo, C)) plus (Ho, Wo)."""
    N, H, W, C = x.shape
    if pad > 0:
        x = jnp.pad(x, ((0, 0), (pad, pad), (pad, pad), (0, 0)),
                    constant_values=fill)
    Ho = (H + 2 * pad - kh) // stride + 1
    Wo = (W + 2 * pad - kw) // stride + 1
    cols = []
    for di in range(kh):
        for dj in range(kw):
            cols.append(x[:, di:di + (Ho - 1) * stride + 1:stride,
                          dj:dj + (Wo - 1) * stride + 1:stride, :])
    return cols, Ho, Wo


def stem_conv_bn(x, wmat, scale, bias, kh, kw, stride, padding, relu=True):
    """Dense 7x7 stem conv via bf16 im2col + fused BN/ReLU matmul epilogue."""
    N = x.shape[0]
    cols, Ho, Wo = _shifted_windows(x, kh, kw, stride, padding, fill=0.0)
    patches = jnp.stack(cols, axis=3)                      # (N, Ho, Wo, kh*kw, Cin)
    a = patches.reshape(N * Ho * Wo, -1)
    y = fused_matmul(a, wmat, scale, bias, relu=relu)
    return y.reshape(N, Ho, Wo, wmat.shape[1])


def conv1x1_bn(x, wmat, scale, bias, residual=None, relu=True, stride=1):
    """1x1 conv with BN (+residual) (+ReLU) fused into the matmul epilogue."""
    if stride > 1:
        x = x[:, ::stride, ::stride, :]
    N, H, W, Cin = x.shape
    Cout = wmat.shape[1]
    a = x.reshape(N * H * W, Cin)
    r = None if residual is None else residual.reshape(N * H * W, Cout)
    y = fused_matmul(a, wmat, scale, bias, residual=r, relu=relu)
    return y.reshape(N, H, W, Cout)


def grouped_conv3x3_bn(x, wbd, scale, bias, stride, relu=True):
    """ResNeXt 32x4d grouped 3x3 conv + BN + ReLU.

    Activation is laid out chunk-major with the 9 taps folded into the
    contraction dim (K = 1152 per 128-channel chunk); weight is the
    precomputed block-diagonal (n_chunks, 1152, 128) pack.
    """
    N = x.shape[0]
    n_chunks = wbd.shape[0]
    cols, Ho, Wo = _shifted_windows(x, 3, 3, stride, 1, fill=0.0)
    M = N * Ho * Wo
    # columns for chunk c: [tap0 ch c*128..c*128+127 | tap1 ... | tap8 ...]
    pieces = [cols[k][..., c * CHUNK:(c + 1) * CHUNK]
              for c in range(n_chunks) for k in range(TAPS)]
    a = jnp.concatenate(pieces, axis=-1).reshape(M, n_chunks * TAPS * CHUNK)
    y = chunked_group_matmul(a, wbd, scale, bias, relu=relu)
    return y.reshape(N, Ho, Wo, n_chunks * CHUNK)


def maxpool2d(x, k=3, stride=2, pad=1):
    N, H, W, C = x.shape
    cols, Ho, Wo = _shifted_windows(x, k, k, stride, pad, fill=-1e30)
    stacked = jnp.stack(cols, axis=0).reshape(k * k, N * Ho * Wo, C)
    out = pallas_window_max(stacked)
    return out.reshape(N, Ho, Wo, C)


# --------------------------------------------------------------------------
# One-time parameter preparation (all weight-side layout work lives here)
# --------------------------------------------------------------------------

def bn_scale_bias(bn, eps=1e-5):
    # inference-mode BatchNorm fold (f32), as in model.eval()
    scale = bn['gamma'] / jnp.sqrt(bn['var'] + eps)
    bias = bn['beta'] - bn['mean'] * scale
    return scale, bias


def _prep_group_weight(w):
    """(Cout, Cg, 3, 3) grouped weight -> (n_chunks, 9*128, 128) block-diagonal bf16."""
    Cout, Cg, kh, kw = w.shape
    Cout_g = Cout // GROUPS
    assert Cg == Cout_g and Cout % CHUNK == 0
    P = CHUNK // Cout_g
    n_chunks = Cout // CHUNK
    w6 = w.reshape(n_chunks, P, Cout_g, Cg, kh, kw)
    w6 = jnp.transpose(w6, (0, 4, 5, 1, 3, 2))             # (c, kh, kw, p, i, o)
    w6 = w6.reshape(n_chunks, TAPS, P, Cg, Cout_g)
    eye = jnp.eye(P, dtype=w.dtype)
    wbd = jnp.einsum('ckpio,pq->ckpiqo', w6, eye)           # zeros off-diagonal
    wbd = wbd.reshape(n_chunks, TAPS * P * Cg, P * Cout_g)  # (c, 1152, 128)
    return wbd.astype(jnp.bfloat16)


def prepare_params(params):
    """Fold BN, transpose / pack / pad / cast every weight exactly once."""
    prep = {}
    # ---- stem (7x7), output padded 64 -> 128 channels (pad channels are exact zeros)
    s, b = bn_scale_bias(params['bn1'])
    w = params['conv1']                                     # (64, 3, 7, 7)
    cout = w.shape[0]
    wmat = jnp.transpose(w, (2, 3, 1, 0)).reshape(-1, cout)
    prep['stem'] = {
        'w': jnp.pad(wmat, ((0, 0), (0, STEM_C - cout))).astype(jnp.bfloat16),
        'scale': jnp.pad(s, (0, STEM_C - cout), constant_values=1.0).astype(jnp.float32),
        'bias': jnp.pad(b, (0, STEM_C - cout)).astype(jnp.float32),
    }
    # ---- stages
    stages = []
    for si, blocks in enumerate(params['layers']):
        pblocks = []
        for bi, blk in enumerate(blocks):
            pb = {}
            s1, b1 = bn_scale_bias(blk['bn1'])
            s2, b2 = bn_scale_bias(blk['bn2'])
            s3, b3 = bn_scale_bias(blk['bn3'])

            w1 = blk['conv1']
            w1m = w1.reshape(w1.shape[0], w1.shape[1]).T
            if si == 0 and bi == 0:                          # consumes 128-padded stem
                w1m = jnp.pad(w1m, ((0, STEM_C - w1m.shape[0]), (0, 0)))
            pb['conv1'] = {'w': w1m.astype(jnp.bfloat16),
                           'scale': s1.astype(jnp.float32), 'bias': b1.astype(jnp.float32)}

            pb['conv2'] = {'w': _prep_group_weight(blk['conv2']),
                           'scale': s2.astype(jnp.float32), 'bias': b2.astype(jnp.float32)}

            w3 = blk['conv3']
            pb['conv3'] = {'w': w3.reshape(w3.shape[0], w3.shape[1]).T.astype(jnp.bfloat16),
                           'scale': s3.astype(jnp.float32), 'bias': b3.astype(jnp.float32)}

            if 'down_conv' in blk:
                sd, bd = bn_scale_bias(blk['down_bn'])
                wd = blk['down_conv']
                wdm = wd.reshape(wd.shape[0], wd.shape[1]).T
                if si == 0 and bi == 0:
                    wdm = jnp.pad(wdm, ((0, STEM_C - wdm.shape[0]), (0, 0)))
                pb['down'] = {'w': wdm.astype(jnp.bfloat16),
                              'scale': sd.astype(jnp.float32), 'bias': bd.astype(jnp.float32)}
            pblocks.append(pb)
        stages.append(pblocks)
    prep['layers'] = stages
    fc = params['fc']
    prep['fc'] = {'w': fc['w'].T.astype(jnp.float32),
                  'scale': jnp.ones((fc['b'].shape[0],), jnp.float32),
                  'b': fc['b'].astype(jnp.float32)}
    return prep


# --------------------------------------------------------------------------
# ResNeXt-50 32x4d forward
# --------------------------------------------------------------------------

def bottleneck_forward(x, pb, stride):
    c1, c2, c3 = pb['conv1'], pb['conv2'], pb['conv3']
    h = conv1x1_bn(x, c1['w'], c1['scale'], c1['bias'], relu=True)
    h = grouped_conv3x3_bn(h, c2['w'], c2['scale'], c2['bias'], stride, relu=True)

    if 'down' in pb:
        d = pb['down']
        identity = conv1x1_bn(x, d['w'], d['scale'], d['bias'], relu=False, stride=stride)
    else:
        identity = x

    # conv3 + BN3 + residual add + ReLU, all fused in the matmul epilogue
    return conv1x1_bn(h, c3['w'], c3['scale'], c3['bias'], residual=identity, relu=True)


def resnext50_forward(prep, x_nchw):
    # input NCHW (PyTorch), internal NHWC bf16 activations, f32 logits out.
    x = jnp.transpose(x_nchw, (0, 2, 3, 1)).astype(jnp.bfloat16)
    st = prep['stem']
    h = stem_conv_bn(x, st['w'], st['scale'], st['bias'], 7, 7,
                     stride=2, padding=3, relu=True)
    h = maxpool2d(h, 3, 2, 1)
    for si, blocks in enumerate(prep['layers']):
        for bi, pb in enumerate(blocks):
            stride = STAGE_STRIDES[si] if bi == 0 else 1
            h = bottleneck_forward(h, pb, stride)
    N, H, W, C = h.shape
    pooled = pallas_global_avgpool(h.reshape(N, H * W, C))        # (N, 2048) f32
    fc = prep['fc']
    logits = fused_matmul(pooled, fc['w'], fc['scale'], fc['b'],
                          relu=False, out_dtype=jnp.float32)      # bias fused
    return logits


resnext50_apply = jax.jit(resnext50_forward)


# --------------------------------------------------------------------------
# Parameter generation (torchvision-like shapes, deterministic)
# --------------------------------------------------------------------------

class _ParamGen:
    def __init__(self, seed):
        self._key = jax.random.PRNGKey(seed)

    def _next(self):
        self._key, k = jax.random.split(self._key)
        return k

    def conv(self, cout, cin_g, kh, kw):
        fan_in = cin_g * kh * kw
        std = (2.0 / fan_in) ** 0.5
        return std * jax.random.normal(self._next(), (cout, cin_g, kh, kw), jnp.float32)

    def bn(self, c):
        return {
            'gamma': 1.0 + 0.1 * jax.random.normal(self._next(), (c,), jnp.float32),
            'beta': 0.1 * jax.random.normal(self._next(), (c,), jnp.float32),
            'mean': 0.1 * jax.random.normal(self._next(), (c,), jnp.float32),
            'var': 0.5 + jax.random.uniform(self._next(), (c,), jnp.float32),
        }

    def linear(self, cin, cout):
        bound = (1.0 / cin) ** 0.5
        return {
            'w': bound * jax.random.normal(self._next(), (cout, cin), jnp.float32),
            'b': bound * jax.random.normal(self._next(), (cout,), jnp.float32),
        }


def make_resnext50_32x4d_params(targets=5, seed=0):
    g = _ParamGen(seed)
    params = {'conv1': g.conv(64, 3, 7, 7), 'bn1': g.bn(64)}
    stage_cfg = [(64, 3, 1), (128, 4, 2), (256, 6, 2), (512, 3, 2)]
    inplanes = 64
    layers = []
    for planes, n_blocks, stride in stage_cfg:
        width = int(planes * BASE_WIDTH / 64) * GROUPS
        blocks = []
        for bi in range(n_blocks):
            s = stride if bi == 0 else 1
            blk = {
                'conv1': g.conv(width, inplanes, 1, 1), 'bn1': g.bn(width),
                'conv2': g.conv(width, width // GROUPS, 3, 3), 'bn2': g.bn(width),
                'conv3': g.conv(planes * EXPANSION, width, 1, 1),
                'bn3': g.bn(planes * EXPANSION),
            }
            if s != 1 or inplanes != planes * EXPANSION:
                blk['down_conv'] = g.conv(planes * EXPANSION, inplanes, 1, 1)
                blk['down_bn'] = g.bn(planes * EXPANSION)
            blocks.append(blk)
            inplanes = planes * EXPANSION
        layers.append(blocks)
    params['layers'] = layers
    params['fc'] = g.linear(512 * EXPANSION, targets)
    return params


if __name__ == "__main__":
    params = make_resnext50_32x4d_params(targets=5, seed=0)
    prep = prepare_params(params)                     # one-time weight packing
    prep = jax.block_until_ready(prep)
    x = jax.random.normal(jax.random.PRNGKey(0), (2, 3, 64, 64), jnp.float32)  # NCHW
    logits = resnext50_apply(prep, x)
    logits = jax.block_until_ready(logits)
    assert logits.shape == (2, 5)
    assert bool(jnp.all(jnp.isfinite(logits)))
    print("KERNEL_OK")
</pallas_src>

<mosaic_0001>
module attributes {stable_mosaic.version = 11 : i64} {
  func.func @_mm_kernel_single_k(%arg0: i32, %arg1: i32, %arg2: memref<512x256xbf16, #tpu.memory_space<vmem>>, %arg3: memref<256x128xbf16, #tpu.memory_space<vmem>>, %arg4: memref<1x128xf32, #tpu.memory_space<vmem>>, %arg5: memref<1x128xf32, #tpu.memory_space<vmem>>, %arg6: memref<512x128xbf16, #tpu.memory_space<vmem>>) attributes {dimension_semantics = [#tpu.dimension_semantics<parallel>, #tpu.dimension_semantics<parallel>], iteration_bounds = array<i64: 4, 1>, scalar_prefetch = 0 : i64, scratch_operands = 0 : i64, tpu.core_type = #tpu.core_type<tc>, window_params = [{transform_indices = @transform_0, window_bounds = array<i64: 512, 256>}, {transform_indices = @transform_1, window_bounds = array<i64: 256, 128>}, {transform_indices = @transform_2, window_bounds = array<i64: 1, 128>}, {transform_indices = @transform_3, window_bounds = array<i64: 1, 128>}, {transform_indices = @transform_4, window_bounds = array<i64: 512, 128>}]} {
    %c0 = arith.constant 0 : index
    %c0_0 = arith.constant 0 : index
    %0 = vector.load %arg2[%c0, %c0_0] : memref<512x256xbf16, #tpu.memory_space<vmem>>, vector<512x256xbf16>
    %c0_1 = arith.constant 0 : index
    %c0_2 = arith.constant 0 : index
    %1 = vector.load %arg3[%c0_1, %c0_2] : memref<256x128xbf16, #tpu.memory_space<vmem>>, vector<256x128xbf16>
    %cst = arith.constant dense<0.000000e+00> : vector<512x128xf32>
    %2 = tpu.matmul %0, %1, %cst {dimension_numbers = #tpu.dot_dimension_numbers<[1], [0], [0], [1], [0, 0, 1, 1], [], []>} : vector<512x256xbf16>, vector<256x128xbf16>, vector<512x128xf32> -> vector<512x128xf32>
    %c0_3 = arith.constant 0 : index
    %c0_4 = arith.constant 0 : index
    %3 = vector.load %arg4[%c0_3, %c0_4] : memref<1x128xf32, #tpu.memory_space<vmem>>, vector<1x128xf32>
    %4 = vector.broadcast %3 : vector<1x128xf32> to vector<512x128xf32>
    %5 = arith.mulf %2, %4 : vector<512x128xf32>
    %c0_5 = arith.constant 0 : index
    %c0_6 = arith.constant 0 : index
    %6 = vector.load %arg5[%c0_5, %c0_6] : memref<1x128xf32, #tpu.memory_space<vmem>>, vector<1x128xf32>
    %7 = vector.broadcast %6 : vector<1x128xf32> to vector<512x128xf32>
    %8 = arith.addf %5, %7 : vector<512x128xf32>
    %cst_7 = arith.constant 0.000000e+00 : f32
    %9 = vector.broadcast %cst_7 : f32 to vector<512x128xf32>
    %10 = arith.maximumf %8, %9 : vector<512x128xf32>
    %11 = arith.truncf %10 : vector<512x128xf32> to vector<512x128xbf16>
    %c0_8 = arith.constant 0 : index
    %c0_9 = arith.constant 0 : index
    %12 = vector.load %arg6[%c0_8, %c0_9] : memref<512x128xbf16, #tpu.memory_space<vmem>>, vector<512x128xbf16>
    tpu.vector_store %arg6[%c0_8, %c0_9], %11 {strides = array<i32>} : memref<512x128xbf16, #tpu.memory_space<vmem>>, vector<512x128xbf16>,
    return
  }
  func.func @transform_0(%arg0: i32, %arg1: i32) -> (i32, i32) {
    %c0_i32 = arith.constant 0 : i32
    %c0_i32_0 = arith.constant 0 : i32
    return %arg0, %c0_i32 : i32, i32
  }
  func.func @transform_1(%arg0: i32, %arg1: i32) -> (i32, i32) {
    %c0_i32 = arith.constant 0 : i32
    %c0_i32_0 = arith.constant 0 : i32
    return %c0_i32, %arg1 : i32, i32
  }
  func.func @transform_2(%arg0: i32, %arg1: i32) -> (i32, i32) {
    %c0_i32 = arith.constant 0 : i32
    %c0_i32_0 = arith.constant 0 : i32
    return %c0_i32, %arg1 : i32, i32
  }
  func.func @transform_3(%arg0: i32, %arg1: i32) -> (i32, i32) {
    %c0_i32 = arith.constant 0 : i32
    %c0_i32_0 = arith.constant 0 : i32
    return %c0_i32, %arg1 : i32, i32
  }
  func.func @transform_4(%arg0: i32, %arg1: i32) -> (i32, i32) {
    %c0_i32 = arith.constant 0 : i32
    return %arg0, %arg1 : i32, i32
  }
}

</mosaic_0001>

<llo_original>
// kernel: fused_matmul.1
$region0: #{fused_matmul.1}
  #allocation0 [shape = 'u32[]', space=smem, size = 0x4, offset = 0x4, fixed_abs, tag = 'smem constant byte address 0x4 - core index']
  #allocation1 [shape = 'u32[72,128]{1,0:T(1,128)}', space=vmem, size = 0x9000, scoped, tag = 'internal scratch']
  %s0 = inlined_call_operand.vmem [shape: bf16[2048,256], index: 0, kind: input, shape index: {}]
  %s1 = inlined_call_operand.vmem [shape: bf16[256,128], index: 1, kind: input, shape index: {}]
  %s2 = inlined_call_operand.vmem [shape: f32[1,128], index: 2, kind: input, shape index: {}]
  %s3 = inlined_call_operand.vmem [shape: f32[1,128], index: 3, kind: input, shape index: {}]
  %s4 = inlined_call_operand.hbm [shape: bf16[2048,128], index: 4, kind: output, shape index: {}]
  %s5 = sld [smem:[#allocation0]]
  $region49: #{fused_matmul.1} parent=0
    _
  %s7 = ssub.s32 1, %s5
  %s8 = scalar_select 0, %s7, %s5
  $region1: #{fused_matmul.1} parent=0
    #allocation2 [shape = 'u8[262144]{0}', space=vmem, size = 0x40000, scoped, tag = 'output window, operand 0']
    #allocation3 [shape = 's32[2]{0}', space=sflag, size = 0x8, scoped, tag = 'scoped memory for fused_matmul.1']
    %9 = vsyncpa [#allocation3], 0
    %s10 = scalar_lea.sflag [#allocation3], 1
    %11 = vsyncpa %s10, 0
    loop: start=0, step=1, limit=6
    $region2: #{fused_matmul.1} parent=1 // loop_pre_header
      _
    $region3: #{fused_matmul.1} parent=1 // loop_header
      %s13 = sphi 0, %s17
      %p14 = scmp.ge.s32.totalorder %s13, 6
      %s20 = sphi 0, %s32
      %s21 = sphi 0, %s28
      %s22 = sphi 0, %s20
      %s23 = sphi 0, %s21
      %s24 = sphi 0, %s22
      %s25 = sphi 0, %s23
      %s35 = sphi 0, %s37
      %s38 = sphi 0, %s35
      %s39 = sphi 0, %s38
      %s55 = sphi 0, %s39
      %s61 = sphi 0, %s63
      %s64 = sphi 0, %s61
      %s65 = sphi 0, %s64
      %s81 = sphi 0, %s65
      %s87 = sphi 0, %s89
      %s90 = sphi 0, %s87
      %s91 = sphi 0, %s90
      %s107 = sphi 0, %s91
      %s113 = sphi 0, %s115
      %s116 = sphi 0, %s113
      %s117 = sphi 0, %s116
      %s133 = sphi 0, %s117
      %s141 = sphi 0, %s143
      %s144 = sphi 0, %s141
      %s145 = sphi 0, %s144
      %s161 = sphi 0, %s145
    $region4: #{fused_matmul.1} parent=1 // loop_header_branch
      %16 = sbr.rel (%p14) target = $region8
    $region5: #{fused_matmul.1} parent=1 // loop_body
      %s18 = ssub.s32 %s13, 1
      %s19 = ssub.s32 %s13, 2
      %s26 = sadd.s32 1, %s21
      %p27 = scmp.ge.s32.totalorder %s26, 1
      %s28 = scalar_select %p27, 0, %s26
      %s29 = sadd.s32 1, %s20
      %s30 = scalar_select %p27, %s29, %s20
      %p31 = scmp.ge.s32.totalorder %s30, 4
      %s32 = scalar_select %p31, 0, %s30
      %s33 = ssub.s32 %s20, %s32
      %p34 = scmp.eq.s32.totalorder %s33, 0
      %s36 = sadd.s32 %s35, 1
      %s37 = scalar_select %p34, %s35, %s36
      %p40 = pneg %p34
      %p41 = scmp.eq.s32.totalorder %s13, 3
      %p42 = por %p40, %p41
      %p43 = scmp.ne.s32.totalorder %s35, %s38
      %p44 = scmp.eq.s32.totalorder %s13, 0
      %p45 = por %p43, %p44
      %p46 = scmp.ne.s32.totalorder %s35, %s38
      %p47 = scmp.eq.s32.totalorder %s18, 3
      %p48 = por %p46, %p47
      %p49 = scmp.ne.s32.totalorder %s38, %s39
      %p50 = scmp.eq.s32.totalorder %s18, 0
      %p51 = por %p49, %p50
      %p52 = scmp.ne.s32.totalorder %s38, %s39
      %p53 = scmp.eq.s32.totalorder %s19, 3
      %p54 = por %p52, %p53
      %p56 = scmp.ne.s32.totalorder %s39, %s55
      %p57 = scmp.eq.s32.totalorder %s19, 0
      %p58 = por %p56, %p57
      %s59 = ssub.s32 %s21, %s28
      %p60 = scmp.eq.s32.totalorder %s59, 0
      %s62 = sadd.s32 %s61, 1
      %s63 = scalar_select %p60, %s61, %s62
      %p66 = pneg %p60
      %p67 = scmp.eq.s32.totalorder %s13, 3
      %p68 = por %p66, %p67
      %p69 = scmp.ne.s32.totalorder %s61, %s64
      %p70 = scmp.eq.s32.totalorder %s13, 0
      %p71 = por %p69, %p70
      %p72 = scmp.ne.s32.totalorder %s61, %s64
      %p73 = scmp.eq.s32.totalorder %s18, 3
      %p74 = por %p72, %p73
      %p75 = scmp.ne.s32.totalorder %s64, %s65
      %p76 = scmp.eq.s32.totalorder %s18, 0
      %p77 = por %p75, %p76
      %p78 = scmp.ne.s32.totalorder %s64, %s65
      %p79 = scmp.eq.s32.totalorder %s19, 3
      %p80 = por %p78, %p79
      %p82 = scmp.ne.s32.totalorder %s65, %s81
      %p83 = scmp.eq.s32.totalorder %s19, 0
      %p84 = por %p82, %p83
      %s85 = ssub.s32 %s21, %s28
      %p86 = scmp.eq.s32.totalorder %s85, 0
      %s88 = sadd.s32 %s87, 1
      %s89 = scalar_select %p86, %s87, %s88
      %p92 = pneg %p86
      %p93 = scmp.eq.s32.totalorder %s13, 3
      %p94 = por %p92, %p93
      %p95 = scmp.ne.s32.totalorder %s87, %s90
      %p96 = scmp.eq.s32.totalorder %s13, 0
      %p97 = por %p95, %p96
      %p98 = scmp.ne.s32.totalorder %s87, %s90
      %p99 = scmp.eq.s32.totalorder %s18, 3
      %p100 = por %p98, %p99
      %p101 = scmp.ne.s32.totalorder %s90, %s91
      %p102 = scmp.eq.s32.totalorder %s18, 0
      %p103 = por %p101, %p102
      %p104 = scmp.ne.s32.totalorder %s90, %s91
      %p105 = scmp.eq.s32.totalorder %s19, 3
      %p106 = por %p104, %p105
      %p108 = scmp.ne.s32.totalorder %s91, %s107
      %p109 = scmp.eq.s32.totalorder %s19, 0
      %p110 = por %p108, %p109
      %s111 = ssub.s32 %s21, %s28
      %p112 = scmp.eq.s32.totalorder %s111, 0
      %s114 = sadd.s32 %s113, 1
      %s115 = scalar_select %p112, %s113, %s114
      %p118 = pneg %p112
      %p119 = scmp.eq.s32.totalorder %s13, 3
      %p120 = por %p118, %p119
      %p121 = scmp.ne.s32.totalorder %s113, %s116
      %p122 = scmp.eq.s32.totalorder %s13, 0
      %p123 = por %p121, %p122
      %p124 = scmp.ne.s32.totalorder %s113, %s116
      %p125 = scmp.eq.s32.totalorder %s18, 3
      %p126 = por %p124, %p125
      %p127 = scmp.ne.s32.totalorder %s116, %s117
      %p128 = scmp.eq.s32.totalorder %s18, 0
      %p129 = por %p127, %p128
      %p130 = scmp.ne.s32.totalorder %s116, %s117
      %p131 = scmp.eq.s32.totalorder %s19, 3
      %p132 = por %p130, %p131
      %p134 = scmp.ne.s32.totalorder %s117, %s133
      %p135 = scmp.eq.s32.totalorder %s19, 0
      %p136 = por %p134, %p135
      %s137 = ssub.s32 %s20, %s32
      %s138 = ssub.s32 %s21, %s28
      %s139 = sor.u32 %s137, %s138
      %p140 = scmp.eq.s32.totalorder %s139, 0
      %s142 = sadd.s32 %s141, 1
      %s143 = scalar_select %p140, %s141, %s142
      %p146 = pneg %p140
      %p147 = scmp.eq.s32.totalorder %s13, 3
      %p148 = por %p146, %p147
      %p149 = scmp.ne.s32.totalorder %s141, %s144
      %p150 = scmp.eq.s32.totalorder %s13, 0
      %p151 = por %p149, %p150
      %p152 = scmp.ne.s32.totalorder %s141, %s144
      %p153 = scmp.eq.s32.totalorder %s18, 3
      %p154 = por %p152, %p153
      %p155 = scmp.ne.s32.totalorder %s144, %s145
      %p156 = scmp.eq.s32.totalorder %s18, 0
      %p157 = por %p155, %p156
      %p158 = scmp.ne.s32.totalorder %s144, %s145
      %p159 = scmp.eq.s32.totalorder %s19, 3
      %p160 = por %p158, %p159
      %p162 = scmp.ne.s32.totalorder %s145, %s161
      %p163 = scmp.eq.s32.totalorder %s19, 0
      %p164 = por %p162, %p163
      %p165 = scmp.le.s32.totalorder 1, %s13
      %p166 = scmp.lt.s32.totalorder %s13, 5
      %p167 = pnand %p165, %p166
      %p168 = pneg %p167
      // Predicated region
      $region9: #{fused_matmul.1} parent=5 // pred_check
        _
      $region10: #{fused_matmul.1} parent=5 // pred_check_branch
        %170 = sbr.rel (%p167) target = $region12
      $region11: #{fused_matmul.1} parent=5 // pred_region
        %s171 = ssub.s32 %s13, 1
        // Predicated region
        $region13: #{fused_matmul.1} parent=11 // pred_check
          %p172 = pneg %p77
        $region14: #{fused_matmul.1} parent=11 // pred_check_branch
          %174 = sbr.rel (%p172) target = $region16
        $region15: #{fused_matmul.1} parent=11 // pred_region
          %p175 = scmp.lt.s32.totalorder %s23, 0
          %s176 = scalar_select %p175, %s23, 0
          %s177 = smul.addr %s176, 4
          %s178 = scalar_lea.vmem %s1, %s177
        $region16: #{fused_matmul.1} parent=11 // pred_fallthru
          _
        // Predicated region
        $region17: #{fused_matmul.1} parent=11 // pred_check
          %p179 = pneg %p103
        $region18: #{fused_matmul.1} parent=11 // pred_check_branch
          %181 = sbr.rel (%p179) target = $region20
        $region19: #{fused_matmul.1} parent=11 // pred_region
          %p182 = scmp.lt.s32.totalorder %s23, 0
          %s183 = scalar_select %p182, %s23, 0
          %s184 = scalar_lea.vmem %s2, %s183
        $region20: #{fused_matmul.1} parent=11 // pred_fallthru
          _
        // Predicated region
        $region21: #{fused_matmul.1} parent=11 // pred_check
          %p185 = pneg %p129
        $region22: #{fused_matmul.1} parent=11 // pred_check_branch
          %187 = sbr.rel (%p185) target = $region24
        $region23: #{fused_matmul.1} parent=11 // pred_region
          %p188 = scmp.lt.s32.totalorder %s23, 0
          %s189 = scalar_select %p188, %s23, 0
          %s190 = scalar_lea.vmem %s3, %s189
        $region24: #{fused_matmul.1} parent=11 // pred_fallthru
          _
      $region12: #{fused_matmul.1} parent=5 // pred_fallthru
        _
      %p191 = scmp.lt.s32.totalorder %s13, 4
      // Predicated region
      $region25: #{fused_matmul.1} parent=5 // pred_check
        %p192 = pneg %p191
      $region26: #{fused_matmul.1} parent=5 // pred_check_branch
        %194 = sbr.rel (%p192) target = $region28
      $region27: #{fused_matmul.1} parent=5 // pred_region
        // Predicated region
        $region29: #{fused_matmul.1} parent=27 // pred_check
          %p195 = pneg %p45
        $region30: #{fused_matmul.1} parent=27 // pred_check_branch
          %197 = sbr.rel (%p195) target = $region32
        $region31: #{fused_matmul.1} parent=27 // pred_region
          %s198 = smul.u32 64, %s20
          %p199 = scmp.lt.s32.totalorder %s198, 255
          %s200 = scalar_select %p199, %s198, 255
          %s201 = smul.addr %s200, 2
          %s202 = smul.addr %s201, 4
          %s203 = scalar_lea.vmem %s0, %s202
          %s204 = smul.u32 64, %s20
        $region32: #{fused_matmul.1} parent=27 // pred_fallthru
          _
      $region28: #{fused_matmul.1} parent=5 // pred_fallthru
        _
      %p205 = scmp.le.s32.totalorder 1, %s13
      %p206 = scmp.lt.s32.totalorder %s13, 5
      %p207 = pnand %p205, %p206
      %p208 = pneg %p207
      // Predicated region
      $region33: #{fused_matmul.1} parent=5 // pred_check
        _
      $region34: #{fused_matmul.1} parent=5 // pred_check_branch
        %210 = sbr.rel (%p207) target = $region36
      $region35: #{fused_matmul.1} parent=5 // pred_region
        %s211 = ssub.s32 %s13, 1
        %s212 = smul.u32 64, %s22
        %p213 = scmp.lt.s32.totalorder %s212, 255
        %s214 = scalar_select %p213, %s212, 255
        %s215 = smul.addr %s214, 2
        %s216 = smul.addr %s215, 4
        %s217 = scalar_lea.vmem %s0, %s216
        %p218 = pneg %p51
        %p219 = pneg %p48
        %p220 = scmp.lt.s32.totalorder %s23, 0
        %s221 = scalar_select %p220, %s23, 0
        %s222 = smul.addr %s221, 4
        %s223 = scalar_lea.vmem %s1, %s222
        %p224 = pneg %p77
        %p225 = pneg %p74
        %p226 = scmp.lt.s32.totalorder %s23, 0
        %s227 = scalar_select %p226, %s23, 0
        %s228 = scalar_lea.vmem %s2, %s227
        %p229 = pneg %p103
        %p230 = pneg %p100
        %p231 = scmp.lt.s32.totalorder %s23, 0
        %s232 = scalar_select %p231, %s23, 0
        %s233 = scalar_lea.vmem %s3, %s232
        %p234 = pneg %p129
        %p235 = pneg %p126
        %p236 = pneg %p157
        %p237 = pneg %p154
        %s238 = sand.u32 %s144, 1
        %s239 = scalar_lea.sflag [#allocation3], %s238
        %s240 = sand.u32 %s144, 1
        %s241 = smul.addr %s240, 256
        %s242 = scalar_lea.vmem [#allocation2], %s241
        %s243 = smul.u32 64, %s22
        %p244 = scmp.lt.s32.totalorder %s243, 255
        %s245 = scalar_select %p244, %s243, 255
        %s246 = smul.addr %s245, 2
        %s247 = smul.addr %s246, 4
        %s248 = scalar_lea.vmem %s0, %s247
        %s249 = smul.u32 64, %s22
        %p250 = scmp.lt.s32.totalorder %s23, 0
        %s251 = scalar_select %p250, %s23, 0
        %s252 = smul.addr %s251, 4
        %s253 = scalar_lea.vmem %s1, %s252
        %p254 = scmp.lt.s32.totalorder %s23, 0
        %s255 = scalar_select %p254, %s23, 0
        %s256 = scalar_lea.vmem %s2, %s255
        %p257 = scmp.lt.s32.totalorder %s23, 0
        %s258 = scalar_select %p257, %s23, 0
        %s259 = scalar_lea.vmem %s3, %s258
        %s260 = smul.u32 64, %s22
        %v261 = vld [vmem:[%s248] sm:$0xff]
        %v262 = vld [vmem:[%s248 + $0x8] sm:$0xff]
        %v263 = vld [vmem:[%s248 + $0x10] sm:$0xff]
        %v264 = vld [vmem:[%s248 + $0x18] sm:$0xff]
        %v265 = vld [vmem:[%s248 + $0x20] sm:$0xff]
        %v266 = vld [vmem:[%s248 + $0x28] sm:$0xff]
        %v267 = vld [vmem:[%s248 + $0x30] sm:$0xff]
        %v268 = vld [vmem:[%s248 + $0x38] sm:$0xff]
        %v269 = vld [vmem:[%s248 + $0x40] sm:$0xff]
        %v270 = vld [vmem:[%s248 + $0x48] sm:$0xff]
        %v271 = vld [vmem:[%s248 + $0x50] sm:$0xff]
        %v272 = vld [vmem:[%s248 + $0x58] sm:$0xff]
        %v273 = vld [vmem:[%s248 + $0x60] sm:$0xff]
        %v274 = vld [vmem:[%s248 + $0x68] sm:$0xff]
        %v275 = vld [vmem:[%s248 + $0x70] sm:$0xff]
        %v276 = vld [vmem:[%s248 + $0x78] sm:$0xff]
        %v277 = vld [vmem:[%s248 + $0x80] sm:$0xff]
        %v278 = vld [vmem:[%s248 + $0x88] sm:$0xff]
        %v279 = vld [vmem:[%s248 + $0x90] sm:$0xff]
        %v280 = vld [vmem:[%s248 + $0x98] sm:$0xff]
        %v281 = vld [vmem:[%s248 + $0xa0] sm:$0xff]
        %v282 = vld [vmem:[%s248 + $0xa8] sm:$0xff]
        %v283 = vld [vmem:[%s248 + $0xb0] sm:$0xff]
        %v284 = vld [vmem:[%s248 + $0xb8] sm:$0xff]
        %v285 = vld [vmem:[%s248 + $0xc0] sm:$0xff]
        %v286 = vld [vmem:[%s248 + $0xc8] sm:$0xff]
        %v287 = vld [vmem:[%s248 + $0xd0] sm:$0xff]
        %v288 = vld [vmem:[%s248 + $0xd8] sm:$0xff]
        %v289 = vld [vmem:[%s248 + $0xe0] sm:$0xff]
        %v290 = vld [vmem:[%s248 + $0xe8] sm:$0xff]
        %v291 = vld [vmem:[%s248 + $0xf0] sm:$0xff]
        %v292 = vld [vmem:[%s248 + $0xf8] sm:$0xff]
        %v293 = vld [vmem:[%s248 + $0x100] sm:$0xff]
        %v294 = vld [vmem:[%s248 + $0x108] sm:$0xff]
        %v295 = vld [vmem:[%s248 + $0x110] sm:$0xff]
        %v296 = vld [vmem:[%s248 + $0x118] sm:$0xff]
        %v297 = vld [vmem:[%s248 + $0x120] sm:$0xff]
        %v298 = vld [vmem:[%s248 + $0x128] sm:$0xff]
        %v299 = vld [vmem:[%s248 + $0x130] sm:$0xff]
        %v300 = vld [vmem:[%s248 + $0x138] sm:$0xff]
        %v301 = vld [vmem:[%s248 + $0x140] sm:$0xff]
        %v302 = vld [vmem:[%s248 + $0x148] sm:$0xff]
        %v303 = vld [vmem:[%s248 + $0x150] sm:$0xff]
        %v304 = vld [vmem:[%s248 + $0x158] sm:$0xff]
        %v305 = vld [vmem:[%s248 + $0x160] sm:$0xff]
        %v306 = vld [vmem:[%s248 + $0x168] sm:$0xff]
        %v307 = vld [vmem:[%s248 + $0x170] sm:$0xff]
        %v308 = vld [vmem:[%s248 + $0x178] sm:$0xff]
        %v309 = vld [vmem:[%s248 + $0x180] sm:$0xff]
        %v310 = vld [vmem:[%s248 + $0x188] sm:$0xff]
        %v311 = vld [vmem:[%s248 + $0x190] sm:$0xff]
        %v312 = vld [vmem:[%s248 + $0x198] sm:$0xff]
        %v313 = vld [vmem:[%s248 + $0x1a0] sm:$0xff]
        %v314 = vld [vmem:[%s248 + $0x1a8] sm:$0xff]
        %v315 = vld [vmem:[%s248 + $0x1b0] sm:$0xff]
        %v316 = vld [vmem:[%s248 + $0x1b8] sm:$0xff]
        %v317 = vld [vmem:[%s248 + $0x1c0] sm:$0xff]
        %v318 = vld [vmem:[%s248 + $0x1c8] sm:$0xff]
        %v319 = vld [vmem:[%s248 + $0x1d0] sm:$0xff]
        %v320 = vld [vmem:[%s248 + $0x1d8] sm:$0xff]
        %v321 = vld [vmem:[%s248 + $0x1e0] sm:$0xff]
        %v322 = vld [vmem:[%s248 + $0x1e8] sm:$0xff]
        %v323 = vld [vmem:[%s248 + $0x1f0] sm:$0xff]
        %v324 = vld [vmem:[%s248 + $0x1f8] sm:$0xff]
        %v325 = vld [vmem:[%s253] sm:$0xf]
        %v326 = vld [vmem:[%s253 + $0x4] sm:$0xf]
        %v327 = vld [vmem:[%s253 + $0x8] sm:$0xf]
        %v328 = vld [vmem:[%s253 + $0xc] sm:$0xf]
        %v329 = vld [vmem:[%s253 + $0x10] sm:$0xf]
        %v330 = vld [vmem:[%s253 + $0x14] sm:$0xf]
        %v331 = vld [vmem:[%s253 + $0x18] sm:$0xf]
        %v332 = vld [vmem:[%s253 + $0x1c] sm:$0xf]
        %v333 = vld [vmem:[%s253 + $0x20] sm:$0xf]
        %v334 = vld [vmem:[%s253 + $0x24] sm:$0xf]
        %v335 = vld [vmem:[%s253 + $0x28] sm:$0xf]
        %v336 = vld [vmem:[%s253 + $0x2c] sm:$0xf]
        %v337 = vld [vmem:[%s253 + $0x30] sm:$0xf]
        %v338 = vld [vmem:[%s253 + $0x34] sm:$0xf]
        %v339 = vld [vmem:[%s253 + $0x38] sm:$0xf]
        %v340 = vld [vmem:[%s253 + $0x3c] sm:$0xf]
        %v341 = vld [vmem:[%s253 + $0x40] sm:$0xf]
        %v342 = vld [vmem:[%s253 + $0x44] sm:$0xf]
        %v343 = vld [vmem:[%s253 + $0x48] sm:$0xf]
        %v344 = vld [vmem:[%s253 + $0x4c] sm:$0xf]
        %v345 = vld [vmem:[%s253 + $0x50] sm:$0xf]
        %v346 = vld [vmem:[%s253 + $0x54] sm:$0xf]
        %v347 = vld [vmem:[%s253 + $0x58] sm:$0xf]
        %v348 = vld [vmem:[%s253 + $0x5c] sm:$0xf]
        %v349 = vld [vmem:[%s253 + $0x60] sm:$0xf]
        %v350 = vld [vmem:[%s253 + $0x64] sm:$0xf]
        %v351 = vld [vmem:[%s253 + $0x68] sm:$0xf]
        %v352 = vld [vmem:[%s253 + $0x6c] sm:$0xf]
        %v353 = vld [vmem:[%s253 + $0x70] sm:$0xf]
        %v354 = vld [vmem:[%s253 + $0x74] sm:$0xf]
        %v355 = vld [vmem:[%s253 + $0x78] sm:$0xf]
        %v356 = vld [vmem:[%s253 + $0x7c] sm:$0xf]
        %v421 = vunpack.c.l.b16 %v261
        %v422 = vunpack.c.h.b16 %v261
        %v423 = vunpack.c.l.b16 %v262
        %v424 = vunpack.c.h.b16 %v262
        %v425 = vunpack.c.l.b16 %v263
        %v426 = vunpack.c.h.b16 %v263
        %v427 = vunpack.c.l.b16 %v264
        %v428 = vunpack.c.h.b16 %v264
        %v429 = vunpack.c.l.b16 %v265
        %v430 = vunpack.c.h.b16 %v265
        %v431 = vunpack.c.l.b16 %v266
        %v432 = vunpack.c.h.b16 %v266
        %v433 = vunpack.c.l.b16 %v267
        %v434 = vunpack.c.h.b16 %v267
        %v435 = vunpack.c.l.b16 %v268
        %v436 = vunpack.c.h.b16 %v268
        %v437 = vunpack.c.l.b16 %v269
        %v438 = vunpack.c.h.b16 %v269
        %v439 = vunpack.c.l.b16 %v270
        %v440 = vunpack.c.h.b16 %v270
        %v441 = vunpack.c.l.b16 %v271
        %v442 = vunpack.c.h.b16 %v271
        %v443 = vunpack.c.l.b16 %v272
        %v444 = vunpack.c.h.b16 %v272
        %v445 = vunpack.c.l.b16 %v273
        %v446 = vunpack.c.h.b16 %v273
        %v447 = vunpack.c.l.b16 %v274
        %v448 = vunpack.c.h.b16 %v274
        %v449 = vunpack.c.l.b16 %v275
        %v450 = vunpack.c.h.b16 %v275
        %v451 = vunpack.c.l.b16 %v276
        %v452 = vunpack.c.h.b16 %v276
        %v453 = vunpack.c.l.b16 %v277
        %v454 = vunpack.c.h.b16 %v277
        %v455 = vunpack.c.l.b16 %v278
        %v456 = vunpack.c.h.b16 %v278
        %v457 = vunpack.c.l.b16 %v279
        %v458 = vunpack.c.h.b16 %v279
        %v459 = vunpack.c.l.b16 %v280
        %v460 = vunpack.c.h.b16 %v280
        %v461 = vunpack.c.l.b16 %v281
        %v462 = vunpack.c.h.b16 %v281
        %v463 = vunpack.c.l.b16 %v282
        %v464 = vunpack.c.h.b16 %v282
        %v465 = vunpack.c.l.b16 %v283
        %v466 = vunpack.c.h.b16 %v283
        %v467 = vunpack.c.l.b16 %v284
        %v468 = vunpack.c.h.b16 %v284
        %v469 = vunpack.c.l.b16 %v285
        %v470 = vunpack.c.h.b16 %v285
        %v471 = vunpack.c.l.b16 %v286
        %v472 = vunpack.c.h.b16 %v286
        %v473 = vunpack.c.l.b16 %v287
        %v474 = vunpack.c.h.b16 %v287
        %v475 = vunpack.c.l.b16 %v288
        %v476 = vunpack.c.h.b16 %v288
        %v477 = vunpack.c.l.b16 %v289
        %v478 = vunpack.c.h.b16 %v289
        %v479 = vunpack.c.l.b16 %v290
        %v480 = vunpack.c.h.b16 %v290
        %v481 = vunpack.c.l.b16 %v291
        %v482 = vunpack.c.h.b16 %v291
        %v483 = vunpack.c.l.b16 %v292
        %v484 = vunpack.c.h.b16 %v292
        %v485 = vunpack.c.l.b16 %v293
        %v486 = vunpack.c.h.b16 %v293
        %v487 = vunpack.c.l.b16 %v294
        %v488 = vunpack.c.h.b16 %v294
        %v489 = vunpack.c.l.b16 %v295
        %v490 = vunpack.c.h.b16 %v295
        %v491 = vunpack.c.l.b16 %v296
        %v492 = vunpack.c.h.b16 %v296
        %v493 = vunpack.c.l.b16 %v297
        %v494 = vunpack.c.h.b16 %v297
        %v495 = vunpack.c.l.b16 %v298
        %v496 = vunpack.c.h.b16 %v298
        %v497 = vunpack.c.l.b16 %v299
        %v498 = vunpack.c.h.b16 %v299
        %v499 = vunpack.c.l.b16 %v300
        %v500 = vunpack.c.h.b16 %v300
        %v501 = vunpack.c.l.b16 %v301
        %v502 = vunpack.c.h.b16 %v301
        %v503 = vunpack.c.l.b16 %v302
        %v504 = vunpack.c.h.b16 %v302
        %v505 = vunpack.c.l.b16 %v303
        %v506 = vunpack.c.h.b16 %v303
        %v507 = vunpack.c.l.b16 %v304
        %v508 = vunpack.c.h.b16 %v304
        %v509 = vunpack.c.l.b16 %v305
        %v510 = vunpack.c.h.b16 %v305
        %v511 = vunpack.c.l.b16 %v306
        %v512 = vunpack.c.h.b16 %v306
        %v513 = vunpack.c.l.b16 %v307
        %v514 = vunpack.c.h.b16 %v307
        %v515 = vunpack.c.l.b16 %v308
        %v516 = vunpack.c.h.b16 %v308
        %v517 = vunpack.c.l.b16 %v309
        %v518 = vunpack.c.h.b16 %v309
        %v519 = vunpack.c.l.b16 %v310
        %v520 = vunpack.c.h.b16 %v310
        %v521 = vunpack.c.l.b16 %v311
        %v522 = vunpack.c.h.b16 %v311
        %v523 = vunpack.c.l.b16 %v312
        %v524 = vunpack.c.h.b16 %v312
        %v525 = vunpack.c.l.b16 %v313
        %v526 = vunpack.c.h.b16 %v313
        %v527 = vunpack.c.l.b16 %v314
        %v528 = vunpack.c.h.b16 %v314
        %v529 = vunpack.c.l.b16 %v315
        %v530 = vunpack.c.h.b16 %v315
        %v531 = vunpack.c.l.b16 %v316
        %v532 = vunpack.c.h.b16 %v316
        %v533 = vunpack.c.l.b16 %v317
        %v534 = vunpack.c.h.b16 %v317
        %v535 = vunpack.c.l.b16 %v318
        %v536 = vunpack.c.h.b16 %v318
        %v537 = vunpack.c.l.b16 %v319
        %v538 = vunpack.c.h.b16 %v319
        %v539 = vunpack.c.l.b16 %v320
        %v540 = vunpack.c.h.b16 %v320
        %v541 = vunpack.c.l.b16 %v321
        %v542 = vunpack.c.h.b16 %v321
        %v543 = vunpack.c.l.b16 %v322
        %v544 = vunpack.c.h.b16 %v322
        %v545 = vunpack.c.l.b16 %v323
        %v546 = vunpack.c.h.b16 %v323
        %v547 = vunpack.c.l.b16 %v324
        %v548 = vunpack.c.h.b16 %v324
        %v549 = vpack.c.b16 %v423, %v421
        %v550 = vpack.c.b16 %v424, %v422
        %v551 = vpack.c.b16 %v427, %v425
        %v552 = vpack.c.b16 %v428, %v426
        %v553 = vpack.c.b16 %v431, %v429
        %v554 = vpack.c.b16 %v432, %v430
        %v555 = vpack.c.b16 %v435, %v433
        %v556 = vpack.c.b16 %v436, %v434
        %v557 = vpack.c.b16 %v439, %v437
        %v558 = vpack.c.b16 %v440, %v438
        %v559 = vpack.c.b16 %v443, %v441
        %v560 = vpack.c.b16 %v444, %v442
        %v561 = vpack.c.b16 %v447, %v445
        %v562 = vpack.c.b16 %v448, %v446
        %v563 = vpack.c.b16 %v451, %v449
        %v564 = vpack.c.b16 %v452, %v450
        %v565 = vpack.c.b16 %v455, %v453
        %v566 = vpack.c.b16 %v456, %v454
        %v567 = vpack.c.b16 %v459, %v457
        %v568 = vpack.c.b16 %v460, %v458
        %v569 = vpack.c.b16 %v463, %v461
        %v570 = vpack.c.b16 %v464, %v462
        %v571 = vpack.c.b16 %v467, %v465
        %v572 = vpack.c.b16 %v468, %v466
        %v573 = vpack.c.b16 %v471, %v469
        %v574 = vpack.c.b16 %v472, %v470
        %v575 = vpack.c.b16 %v475, %v473
        %v576 = vpack.c.b16 %v476, %v474
        %v577 = vpack.c.b16 %v479, %v477
        %v578 = vpack.c.b16 %v480, %v478
        %v579 = vpack.c.b16 %v483, %v481
        %v580 = vpack.c.b16 %v484, %v482
        %v581 = vpack.c.b16 %v487, %v485
        %v582 = vpack.c.b16 %v488, %v486
        %v583 = vpack.c.b16 %v491, %v489
        %v584 = vpack.c.b16 %v492, %v490
        %v585 = vpack.c.b16 %v495, %v493
        %v586 = vpack.c.b16 %v496, %v494
        %v587 = vpack.c.b16 %v499, %v497
        %v588 = vpack.c.b16 %v500, %v498
        %v589 = vpack.c.b16 %v503, %v501
        %v590 = vpack.c.b16 %v504, %v502
        %v591 = vpack.c.b16 %v507, %v505
        %v592 = vpack.c.b16 %v508, %v506
        %v593 = vpack.c.b16 %v511, %v509
        %v594 = vpack.c.b16 %v512, %v510
        %v595 = vpack.c.b16 %v515, %v513
        %v596 = vpack.c.b16 %v516, %v514
        %v597 = vpack.c.b16 %v519, %v517
        %v598 = vpack.c.b16 %v520, %v518
        %v599 = vpack.c.b16 %v523, %v521
        %v600 = vpack.c.b16 %v524, %v522
        %v601 = vpack.c.b16 %v527, %v525
        %v602 = vpack.c.b16 %v528, %v526
        %v603 = vpack.c.b16 %v531, %v529
        %v604 = vpack.c.b16 %v532, %v530
        %v605 = vpack.c.b16 %v535, %v533
        %v606 = vpack.c.b16 %v536, %v534
        %v607 = vpack.c.b16 %v539, %v537
        %v608 = vpack.c.b16 %v540, %v538
        %v609 = vpack.c.b16 %v543, %v541
        %v610 = vpack.c.b16 %v544, %v542
        %v611 = vpack.c.b16 %v547, %v545
        %v612 = vpack.c.b16 %v548, %v546
        %v709 = vunpack.c.l.b16 %v325
        %v710 = vunpack.c.l.b16 %v326
        %v711 = vunpack.c.l.b16 %v327
        %v712 = vunpack.c.l.b16 %v328
        %v713 = vunpack.c.l.b16 %v329
        %v714 = vunpack.c.l.b16 %v330
        %v715 = vunpack.c.l.b16 %v331
        %v716 = vunpack.c.l.b16 %v332
        %v717 = vunpack.c.l.b16 %v333
        %v718 = vunpack.c.l.b16 %v334
        %v719 = vunpack.c.l.b16 %v335
        %v720 = vunpack.c.l.b16 %v336
        %v721 = vunpack.c.l.b16 %v337
        %v722 = vunpack.c.l.b16 %v338
        %v723 = vunpack.c.l.b16 %v339
        %v724 = vunpack.c.l.b16 %v340
        %v725 = vunpack.c.l.b16 %v341
        %v726 = vunpack.c.l.b16 %v342
        %v727 = vunpack.c.l.b16 %v343
        %v728 = vunpack.c.l.b16 %v344
        %v729 = vunpack.c.l.b16 %v345
        %v730 = vunpack.c.l.b16 %v346
        %v731 = vunpack.c.l.b16 %v347
        %v732 = vunpack.c.l.b16 %v348
        %v733 = vunpack.c.l.b16 %v349
        %v734 = vunpack.c.l.b16 %v350
        %v735 = vunpack.c.l.b16 %v351
        %v736 = vunpack.c.l.b16 %v352
        %v737 = vunpack.c.l.b16 %v353
        %v738 = vunpack.c.l.b16 %v354
        %v739 = vunpack.c.l.b16 %v355
        %v740 = vunpack.c.l.b16 %v356
        %v741 = vpack.c.b16 %v710, %v709
        %v742 = vpack.c.b16 %v712, %v711
        %v743 = vpack.c.b16 %v714, %v713
        %v744 = vpack.c.b16 %v716, %v715
        %v745 = vpack.c.b16 %v718, %v717
        %v746 = vpack.c.b16 %v720, %v719
        %v747 = vpack.c.b16 %v722, %v721
        %v748 = vpack.c.b16 %v724, %v723
        %v749 = vpack.c.b16 %v726, %v725
        %v750 = vpack.c.b16 %v728, %v727
        %v751 = vpack.c.b16 %v730, %v729
        %v752 = vpack.c.b16 %v732, %v731
        %v753 = vpack.c.b16 %v734, %v733
        %v754 = vpack.c.b16 %v736, %v735
        %v755 = vpack.c.b16 %v738, %v737
        %v756 = vpack.c.b16 %v740, %v739
        %773 = vmatpush.bf16.msra.mxu0 %v748
        %774 = vmatpush.bf16.msra.mxu0 %v747
        %775 = vmatpush.bf16.msra.mxu0 %v746
        %776 = vmatpush.bf16.msra.mxu0 %v745
        %777 = vmatpush.bf16.msra.mxu0 %v744
        %778 = vmatpush.bf16.msra.mxu0 %v743
        %779 = vmatpush.bf16.msra.mxu0 %v742
        %780 = vmatpush.bf16.msra.mxu0 %v741
        %781 = vmatmul.bf16.gmra.mxu0 %v549
        %v782 = vpop.f32.mrf.mxu0
        %v783 = vadd.f32 0.0, %v782
        %v784 = vpop.f32.mrf.mxu0
        %v785 = vadd.f32 0.0, %v784
        %786 = vmatmul.bf16.gmra.mxu0 %v551
        %v787 = vpop.f32.mrf.mxu0
        %v788 = vadd.f32 0.0, %v787
        %v789 = vpop.f32.mrf.mxu0
        %v790 = vadd.f32 0.0, %v789
        %791 = vmatmul.bf16.gmra.mxu0 %v553
        %v792 = vpop.f32.mrf.mxu0
        %v793 = vadd.f32 0.0, %v792
        %v794 = vpop.f32.mrf.mxu0
        %v795 = vadd.f32 0.0, %v794
        %796 = vmatmul.bf16.gmra.mxu0 %v555
        %v797 = vpop.f32.mrf.mxu0
        %v798 = vadd.f32 0.0, %v797
        %v799 = vpop.f32.mrf.mxu0
        %v800 = vadd.f32 0.0, %v799
        %801 = vmatmul.bf16.gmra.mxu0 %v557
        %v802 = vpop.f32.mrf.mxu0
        %v803 = vadd.f32 0.0, %v802
        %v804 = vpop.f32.mrf.mxu0
        %v805 = vadd.f32 0.0, %v804
        %806 = vmatmul.bf16.gmra.mxu0 %v559
        %v807 = vpop.f32.mrf.mxu0
        %v808 = vadd.f32 0.0, %v807
        %v809 = vpop.f32.mrf.mxu0
        %v810 = vadd.f32 0.0, %v809
        %811 = vmatmul.bf16.gmra.mxu0 %v561
        %v812 = vpop.f32.mrf.mxu0
        %v813 = vadd.f32 0.0, %v812
        %v814 = vpop.f32.mrf.mxu0
        %v815 = vadd.f32 0.0, %v814
        %816 = vmatmul.bf16.gmra.mxu0 %v563
        %v817 = vpop.f32.mrf.mxu0
        %v818 = vadd.f32 0.0, %v817
        %v819 = vpop.f32.mrf.mxu0
        %v820 = vadd.f32 0.0, %v819
        %821 = vmatmul.bf16.gmra.mxu0 %v565
        %v822 = vpop.f32.mrf.mxu0
        %v823 = vadd.f32 0.0, %v822
        %v824 = vpop.f32.mrf.mxu0
        %v825 = vadd.f32 0.0, %v824
        %826 = vmatmul.bf16.gmra.mxu0 %v567
        %v827 = vpop.f32.mrf.mxu0
        %v828 = vadd.f32 0.0, %v827
        %v829 = vpop.f32.mrf.mxu0
        %v830 = vadd.f32 0.0, %v829
        %831 = vmatmul.bf16.gmra.mxu0 %v569
        %v832 = vpop.f32.mrf.mxu0
        %v833 = vadd.f32 0.0, %v832
        %v834 = vpop.f32.mrf.mxu0
        %v835 = vadd.f32 0.0, %v834
        %836 = vmatmul.bf16.gmra.mxu0 %v571
        %v837 = vpop.f32.mrf.mxu0
        %v838 = vadd.f32 0.0, %v837
        %v839 = vpop.f32.mrf.mxu0
        %v840 = vadd.f32 0.0, %v839
        %841 = vmatmul.bf16.gmra.mxu0 %v573
        %v842 = vpop.f32.mrf.mxu0
        %v843 = vadd.f32 0.0, %v842
        %v844 = vpop.f32.mrf.mxu0
        %v845 = vadd.f32 0.0, %v844
        %846 = vmatmul.bf16.gmra.mxu0 %v575
        %v847 = vpop.f32.mrf.mxu0
        %v848 = vadd.f32 0.0, %v847
        %v849 = vpop.f32.mrf.mxu0
        %v850 = vadd.f32 0.0, %v849
        %851 = vmatmul.bf16.gmra.mxu0 %v577
        %v852 = vpop.f32.mrf.mxu0
        %v853 = vadd.f32 0.0, %v852
        %v854 = vpop.f32.mrf.mxu0
        %v855 = vadd.f32 0.0, %v854
        %856 = vmatmul.bf16.gmra.mxu0 %v579
        %v857 = vpop.f32.mrf.mxu0
        %v858 = vadd.f32 0.0, %v857
        %v859 = vpop.f32.mrf.mxu0
        %v860 = vadd.f32 0.0, %v859
        %861 = vmatmul.bf16.gmra.mxu0 %v581
        %v862 = vpop.f32.mrf.mxu0
        %v863 = vadd.f32 0.0, %v862
        %v864 = vpop.f32.mrf.mxu0
        %v865 = vadd.f32 0.0, %v864
        %866 = vmatmul.bf16.gmra.mxu0 %v583
        %v867 = vpop.f32.mrf.mxu0
        %v868 = vadd.f32 0.0, %v867
        %v869 = vpop.f32.mrf.mxu0
        %v870 = vadd.f32 0.0, %v869
        %871 = vmatmul.bf16.gmra.mxu0 %v585
        %v872 = vpop.f32.mrf.mxu0
        %v873 = vadd.f32 0.0, %v872
        %v874 = vpop.f32.mrf.mxu0
        %v875 = vadd.f32 0.0, %v874
        %876 = vmatmul.bf16.gmra.mxu0 %v587
        %v877 = vpop.f32.mrf.mxu0
        %v878 = vadd.f32 0.0, %v877
        %v879 = vpop.f32.mrf.mxu0
        %v880 = vadd.f32 0.0, %v879
        %881 = vmatmul.bf16.gmra.mxu0 %v589
        %v882 = vpop.f32.mrf.mxu0
        %v883 = vadd.f32 0.0, %v882
        %v884 = vpop.f32.mrf.mxu0
        %v885 = vadd.f32 0.0, %v884
        %886 = vmatmul.bf16.gmra.mxu0 %v591
        %v887 = vpop.f32.mrf.mxu0
        %v888 = vadd.f32 0.0, %v887
        %v889 = vpop.f32.mrf.mxu0
        %v890 = vadd.f32 0.0, %v889
        %891 = vmatmul.bf16.gmra.mxu0 %v593
        %v892 = vpop.f32.mrf.mxu0
        %v893 = vadd.f32 0.0, %v892
        %v894 = vpop.f32.mrf.mxu0
        %v895 = vadd.f32 0.0, %v894
        %896 = vmatmul.bf16.gmra.mxu0 %v595
        %v897 = vpop.f32.mrf.mxu0
        %v898 = vadd.f32 0.0, %v897
        %v899 = vpop.f32.mrf.mxu0
        %v900 = vadd.f32 0.0, %v899
        %901 = vmatmul.bf16.gmra.mxu0 %v597
        %v902 = vpop.f32.mrf.mxu0
        %v903 = vadd.f32 0.0, %v902
        %v904 = vpop.f32.mrf.mxu0
        %v905 = vadd.f32 0.0, %v904
        %906 = vmatmul.bf16.gmra.mxu0 %v599
        %v907 = vpop.f32.mrf.mxu0
        %v908 = vadd.f32 0.0, %v907
        %v909 = vpop.f32.mrf.mxu0
        %v910 = vadd.f32 0.0, %v909
        %911 = vmatmul.bf16.gmra.mxu0 %v601
        %v912 = vpop.f32.mrf.mxu0
        %v913 = vadd.f32 0.0, %v912
        %v914 = vpop.f32.mrf.mxu0
        %v915 = vadd.f32 0.0, %v914
        %916 = vmatmul.bf16.gmra.mxu0 %v603
        %v917 = vpop.f32.mrf.mxu0
        %v918 = vadd.f32 0.0, %v917
        %v919 = vpop.f32.mrf.mxu0
        %v920 = vadd.f32 0.0, %v919
        %921 = vmatmul.bf16.gmra.mxu0 %v605
        %v922 = vpop.f32.mrf.mxu0
        %v923 = vadd.f32 0.0, %v922
        %v924 = vpop.f32.mrf.mxu0
        %v925 = vadd.f32 0.0, %v924
        %926 = vmatmul.bf16.gmra.mxu0 %v607
        %v927 = vpop.f32.mrf.mxu0
        %v928 = vadd.f32 0.0, %v927
        %v929 = vpop.f32.mrf.mxu0
        %v930 = vadd.f32 0.0, %v929
        %931 = vmatmul.bf16.gmra.mxu0 %v609
        %v932 = vpop.f32.mrf.mxu0
        %v933 = vadd.f32 0.0, %v932
        %v934 = vpop.f32.mrf.mxu0
        %v935 = vadd.f32 0.0, %v934
        %936 = vmatmul.bf16.gmra.mxu0 %v611
        %v937 = vpop.f32.mrf.mxu0
        %v938 = vadd.f32 0.0, %v937
        %v939 = vpop.f32.mrf.mxu0
        %v940 = vadd.f32 0.0, %v939
        %941 = vdwg.mxu0
        %942 = vmatpush.bf16.msra.mxu0 %v756
        %943 = vmatpush.bf16.msra.mxu0 %v755
        %944 = vmatpush.bf16.msra.mxu0 %v754
        %945 = vmatpush.bf16.msra.mxu0 %v753
        %946 = vmatpush.bf16.msra.mxu0 %v752
        %947 = vmatpush.bf16.msra.mxu0 %v751
        %948 = vmatpush.bf16.msra.mxu0 %v750
        %949 = vmatpush.bf16.msra.mxu0 %v749
        %950 = vmatmul.bf16.gmra.mxu0 %v550
        %v951 = vpop.f32.mrf.mxu0
        %v952 = vadd.f32 %v783, %v951
        %v953 = vpop.f32.mrf.mxu0
        %v954 = vadd.f32 %v785, %v953
        %955 = vmatmul.bf16.gmra.mxu0 %v552
        %v956 = vpop.f32.mrf.mxu0
        %v957 = vadd.f32 %v788, %v956
        %v958 = vpop.f32.mrf.mxu0
        %v959 = vadd.f32 %v790, %v958
        %960 = vmatmul.bf16.gmra.mxu0 %v554
        %v961 = vpop.f32.mrf.mxu0
        %v962 = vadd.f32 %v793, %v961
        %v963 = vpop.f32.mrf.mxu0
        %v964 = vadd.f32 %v795, %v963
        %965 = vmatmul.bf16.gmra.mxu0 %v556
        %v966 = vpop.f32.mrf.mxu0
        %v967 = vadd.f32 %v798, %v966
        %v968 = vpop.f32.mrf.mxu0
        %v969 = vadd.f32 %v800, %v968
        %970 = vmatmul.bf16.gmra.mxu0 %v558
        %v971 = vpop.f32.mrf.mxu0
        %v972 = vadd.f32 %v803, %v971
        %v973 = vpop.f32.mrf.mxu0
        %v974 = vadd.f32 %v805, %v973
        %975 = vmatmul.bf16.gmra.mxu0 %v560
        %v976 = vpop.f32.mrf.mxu0
        %v977 = vadd.f32 %v808, %v976
        %v978 = vpop.f32.mrf.mxu0
        %v979 = vadd.f32 %v810, %v978
        %980 = vmatmul.bf16.gmra.mxu0 %v562
        %v981 = vpop.f32.mrf.mxu0
        %v982 = vadd.f32 %v813, %v981
        %v983 = vpop.f32.mrf.mxu0
        %v984 = vadd.f32 %v815, %v983
        %985 = vmatmul.bf16.gmra.mxu0 %v564
        %v986 = vpop.f32.mrf.mxu0
        %v987 = vadd.f32 %v818, %v986
        %v988 = vpop.f32.mrf.mxu0
        %v989 = vadd.f32 %v820, %v988
        %990 = vmatmul.bf16.gmra.mxu0 %v566
        %v991 = vpop.f32.mrf.mxu0
        %v992 = vadd.f32 %v823, %v991
        %v993 = vpop.f32.mrf.mxu0
        %v994 = vadd.f32 %v825, %v993
        %995 = vmatmul.bf16.gmra.mxu0 %v568
        %v996 = vpop.f32.mrf.mxu0
        %v997 = vadd.f32 %v828, %v996
        %v998 = vpop.f32.mrf.mxu0
        %v999 = vadd.f32 %v830, %v998
        %1000 = vmatmul.bf16.gmra.mxu0 %v570
        %v1001 = vpop.f32.mrf.mxu0
        %v1002 = vadd.f32 %v833, %v1001
        %v1003 = vpop.f32.mrf.mxu0
        %v1004 = vadd.f32 %v835, %v1003
        %1005 = vmatmul.bf16.gmra.mxu0 %v572
        %v1006 = vpop.f32.mrf.mxu0
        %v1007 = vadd.f32 %v838, %v1006
        %v1008 = vpop.f32.mrf.mxu0
        %v1009 = vadd.f32 %v840, %v1008
        %1010 = vmatmul.bf16.gmra.mxu0 %v574
        %v1011 = vpop.f32.mrf.mxu0
        %v1012 = vadd.f32 %v843, %v1011
        %v1013 = vpop.f32.mrf.mxu0
        %v1014 = vadd.f32 %v845, %v1013
        %1015 = vmatmul.bf16.gmra.mxu0 %v576
        %v1016 = vpop.f32.mrf.mxu0
        %v1017 = vadd.f32 %v848, %v1016
        %v1018 = vpop.f32.mrf.mxu0
        %v1019 = vadd.f32 %v850, %v1018
        %1020 = vmatmul.bf16.gmra.mxu0 %v578
        %v1021 = vpop.f32.mrf.mxu0
        %v1022 = vadd.f32 %v853, %v1021
        %v1023 = vpop.f32.mrf.mxu0
        %v1024 = vadd.f32 %v855, %v1023
        %1025 = vmatmul.bf16.gmra.mxu0 %v580
        %v1026 = vpop.f32.mrf.mxu0
        %v1027 = vadd.f32 %v858, %v1026
        %v1028 = vpop.f32.mrf.mxu0
        %v1029 = vadd.f32 %v860, %v1028
        %1030 = vmatmul.bf16.gmra.mxu0 %v582
        %v1031 = vpop.f32.mrf.mxu0
        %v1032 = vadd.f32 %v863, %v1031
        %v1033 = vpop.f32.mrf.mxu0
        %v1034 = vadd.f32 %v865, %v1033
        %1035 = vmatmul.bf16.gmra.mxu0 %v584
        %v1036 = vpop.f32.mrf.mxu0
        %v1037 = vadd.f32 %v868, %v1036
        %v1038 = vpop.f32.mrf.mxu0
        %v1039 = vadd.f32 %v870, %v1038
        %1040 = vmatmul.bf16.gmra.mxu0 %v586
        %v1041 = vpop.f32.mrf.mxu0
        %v1042 = vadd.f32 %v873, %v1041
        %v1043 = vpop.f32.mrf.mxu0
        %v1044 = vadd.f32 %v875, %v1043
        %1045 = vmatmul.bf16.gmra.mxu0 %v588
        %v1046 = vpop.f32.mrf.mxu0
        %v1047 = vadd.f32 %v878, %v1046
        %v1048 = vpop.f32.mrf.mxu0
        %v1049 = vadd.f32 %v880, %v1048
        %1050 = vmatmul.bf16.gmra.mxu0 %v590
        %v1051 = vpop.f32.mrf.mxu0
        %v1052 = vadd.f32 %v883, %v1051
        %v1053 = vpop.f32.mrf.mxu0
        %v1054 = vadd.f32 %v885, %v1053
        %1055 = vmatmul.bf16.gmra.mxu0 %v592
        %v1056 = vpop.f32.mrf.mxu0
        %v1057 = vadd.f32 %v888, %v1056
        %v1058 = vpop.f32.mrf.mxu0
        %v1059 = vadd.f32 %v890, %v1058
        %1060 = vmatmul.bf16.gmra.mxu0 %v594
        %v1061 = vpop.f32.mrf.mxu0
        %v1062 = vadd.f32 %v893, %v1061
        %v1063 = vpop.f32.mrf.mxu0
        %v1064 = vadd.f32 %v895, %v1063
        %1065 = vmatmul.bf16.gmra.mxu0 %v596
        %v1066 = vpop.f32.mrf.mxu0
        %v1067 = vadd.f32 %v898, %v1066
        %v1068 = vpop.f32.mrf.mxu0
        %v1069 = vadd.f32 %v900, %v1068
        %1070 = vmatmul.bf16.gmra.mxu0 %v598
        %v1071 = vpop.f32.mrf.mxu0
        %v1072 = vadd.f32 %v903, %v1071
        %v1073 = vpop.f32.mrf.mxu0
        %v1074 = vadd.f32 %v905, %v1073
        %1075 = vmatmul.bf16.gmra.mxu0 %v600
        %v1076 = vpop.f32.mrf.mxu0
        %v1077 = vadd.f32 %v908, %v1076
        %v1078 = vpop.f32.mrf.mxu0
        %v1079 = vadd.f32 %v910, %v1078
        %1080 = vmatmul.bf16.gmra.mxu0 %v602
        %v1081 = vpop.f32.mrf.mxu0
        %v1082 = vadd.f32 %v913, %v1081
        %v1083 = vpop.f32.mrf.mxu0
        %v1084 = vadd.f32 %v915, %v1083
        %1085 = vmatmul.bf16.gmra.mxu0 %v604
        %v1086 = vpop.f32.mrf.mxu0
        %v1087 = vadd.f32 %v918, %v1086
        %v1088 = vpop.f32.mrf.mxu0
        %v1089 = vadd.f32 %v920, %v1088
        %1090 = vmatmul.bf16.gmra.mxu0 %v606
        %v1091 = vpop.f32.mrf.mxu0
        %v1092 = vadd.f32 %v923, %v1091
        %v1093 = vpop.f32.mrf.mxu0
        %v1094 = vadd.f32 %v925, %v1093
        %1095 = vmatmul.bf16.gmra.mxu0 %v608
        %v1096 = vpop.f32.mrf.mxu0
        %v1097 = vadd.f32 %v928, %v1096
        %v1098 = vpop.f32.mrf.mxu0
        %v1099 = vadd.f32 %v930, %v1098
        %1100 = vmatmul.bf16.gmra.mxu0 %v610
        %v1101 = vpop.f32.mrf.mxu0
        %v1102 = vadd.f32 %v933, %v1101
        %v1103 = vpop.f32.mrf.mxu0
        %v1104 = vadd.f32 %v935, %v1103
        %1105 = vmatmul.bf16.gmra.mxu0 %v612
        %v1106 = vpop.f32.mrf.mxu0
        %v1107 = vadd.f32 %v938, %v1106
        %v1108 = vpop.f32.mrf.mxu0
        %v1109 = vadd.f32 %v940, %v1108
        %1110 = vdwg.mxu0
        %v1111 = vld [vmem:[%s256] sm:$0x1]
        %v1113 = vperm.slane %v1111, 0
        %v1115 = vmul.f32 %v952, %v1113
        %v1116 = vmul.f32 %v954, %v1113
        %v1117 = vmul.f32 %v957, %v1113
        %v1118 = vmul.f32 %v959, %v1113
        %v1119 = vmul.f32 %v962, %v1113
        %v1120 = vmul.f32 %v964, %v1113
        %v1121 = vmul.f32 %v967, %v1113
        %v1122 = vmul.f32 %v969, %v1113
        %v1123 = vmul.f32 %v972, %v1113
        %v1124 = vmul.f32 %v974, %v1113
        %v1125 = vmul.f32 %v977, %v1113
        %v1126 = vmul.f32 %v979, %v1113
        %v1127 = vmul.f32 %v982, %v1113
        %v1128 = vmul.f32 %v984, %v1113
        %v1129 = vmul.f32 %v987, %v1113
        %v1130 = vmul.f32 %v989, %v1113
        %v1131 = vmul.f32 %v992, %v1113
        %v1132 = vmul.f32 %v994, %v1113
        %v1133 = vmul.f32 %v997, %v1113
        %v1134 = vmul.f32 %v999, %v1113
        %v1135 = vmul.f32 %v1002, %v1113
        %v1136 = vmul.f32 %v1004, %v1113
        %v1137 = vmul.f32 %v1007, %v1113
        %v1138 = vmul.f32 %v1009, %v1113
        %v1139 = vmul.f32 %v1012, %v1113
        %v1140 = vmul.f32 %v1014, %v1113
        %v1141 = vmul.f32 %v1017, %v1113
        %v1142 = vmul.f32 %v1019, %v1113
        %v1143 = vmul.f32 %v1022, %v1113
        %v1144 = vmul.f32 %v1024, %v1113
        %v1145 = vmul.f32 %v1027, %v1113
        %v1146 = vmul.f32 %v1029, %v1113
        %v1147 = vmul.f32 %v1032, %v1113
        %v1148 = vmul.f32 %v1034, %v1113
        %v1149 = vmul.f32 %v1037, %v1113
        %v1150 = vmul.f32 %v1039, %v1113
        %v1151 = vmul.f32 %v1042, %v1113
        %v1152 = vmul.f32 %v1044, %v1113
        %v1153 = vmul.f32 %v1047, %v1113
        %v1154 = vmul.f32 %v1049, %v1113
        %v1155 = vmul.f32 %v1052, %v1113
        %v1156 = vmul.f32 %v1054, %v1113
        %v1157 = vmul.f32 %v1057, %v1113
        %v1158 = vmul.f32 %v1059, %v1113
        %v1159 = vmul.f32 %v1062, %v1113
        %v1160 = vmul.f32 %v1064, %v1113
        %v1161 = vmul.f32 %v1067, %v1113
        %v1162 = vmul.f32 %v1069, %v1113
        %v1163 = vmul.f32 %v1072, %v1113
        %v1164 = vmul.f32 %v1074, %v1113
        %v1165 = vmul.f32 %v1077, %v1113
        %v1166 = vmul.f32 %v1079, %v1113
        %v1167 = vmul.f32 %v1082, %v1113
        %v1168 = vmul.f32 %v1084, %v1113
        %v1169 = vmul.f32 %v1087, %v1113
        %v1170 = vmul.f32 %v1089, %v1113
        %v1171 = vmul.f32 %v1092, %v1113
        %v1172 = vmul.f32 %v1094, %v1113
        %v1173 = vmul.f32 %v1097, %v1113
        %v1174 = vmul.f32 %v1099, %v1113
        %v1175 = vmul.f32 %v1102, %v1113
        %v1176 = vmul.f32 %v1104, %v1113
        %v1177 = vmul.f32 %v1107, %v1113
        %v1178 = vmul.f32 %v1109, %v1113
        %v1179 = vld [vmem:[%s259] sm:$0x1]
        %v1181 = vperm.slane %v1179, 0
        %v1183 = vadd.f32 %v1115, %v1181
        %v1184 = vadd.f32 %v1116, %v1181
        %v1185 = vadd.f32 %v1117, %v1181
        %v1186 = vadd.f32 %v1118, %v1181
        %v1187 = vadd.f32 %v1119, %v1181
        %v1188 = vadd.f32 %v1120, %v1181
        %v1189 = vadd.f32 %v1121, %v1181
        %v1190 = vadd.f32 %v1122, %v1181
        %v1191 = vadd.f32 %v1123, %v1181
        %v1192 = vadd.f32 %v1124, %v1181
        %v1193 = vadd.f32 %v1125, %v1181
        %v1194 = vadd.f32 %v1126, %v1181
        %v1195 = vadd.f32 %v1127, %v1181
        %v1196 = vadd.f32 %v1128, %v1181
        %v1197 = vadd.f32 %v1129, %v1181
        %v1198 = vadd.f32 %v1130, %v1181
        %v1199 = vadd.f32 %v1131, %v1181
        %v1200 = vadd.f32 %v1132, %v1181
        %v1201 = vadd.f32 %v1133, %v1181
        %v1202 = vadd.f32 %v1134, %v1181
        %v1203 = vadd.f32 %v1135, %v1181
        %v1204 = vadd.f32 %v1136, %v1181
        %v1205 = vadd.f32 %v1137, %v1181
        %v1206 = vadd.f32 %v1138, %v1181
        %v1207 = vadd.f32 %v1139, %v1181
        %v1208 = vadd.f32 %v1140, %v1181
        %v1209 = vadd.f32 %v1141, %v1181
        %v1210 = vadd.f32 %v1142, %v1181
        %v1211 = vadd.f32 %v1143, %v1181
        %v1212 = vadd.f32 %v1144, %v1181
        %v1213 = vadd.f32 %v1145, %v1181
        %v1214 = vadd.f32 %v1146, %v1181
        %v1215 = vadd.f32 %v1147, %v1181
        %v1216 = vadd.f32 %v1148, %v1181
        %v1217 = vadd.f32 %v1149, %v1181
        %v1218 = vadd.f32 %v1150, %v1181
        %v1219 = vadd.f32 %v1151, %v1181
        %v1220 = vadd.f32 %v1152, %v1181
        %v1221 = vadd.f32 %v1153, %v1181
        %v1222 = vadd.f32 %v1154, %v1181
        %v1223 = vadd.f32 %v1155, %v1181
        %v1224 = vadd.f32 %v1156, %v1181
        %v1225 = vadd.f32 %v1157, %v1181
        %v1226 = vadd.f32 %v1158, %v1181
        %v1227 = vadd.f32 %v1159, %v1181
        %v1228 = vadd.f32 %v1160, %v1181
        %v1229 = vadd.f32 %v1161, %v1181
        %v1230 = vadd.f32 %v1162, %v1181
        %v1231 = vadd.f32 %v1163, %v1181
        %v1232 = vadd.f32 %v1164, %v1181
        %v1233 = vadd.f32 %v1165, %v1181
        %v1234 = vadd.f32 %v1166, %v1181
        %v1235 = vadd.f32 %v1167, %v1181
        %v1236 = vadd.f32 %v1168, %v1181
        %v1237 = vadd.f32 %v1169, %v1181
        %v1238 = vadd.f32 %v1170, %v1181
        %v1239 = vadd.f32 %v1171, %v1181
        %v1240 = vadd.f32 %v1172, %v1181
        %v1241 = vadd.f32 %v1173, %v1181
        %v1242 = vadd.f32 %v1174, %v1181
        %v1243 = vadd.f32 %v1175, %v1181
        %v1244 = vadd.f32 %v1176, %v1181
        %v1245 = vadd.f32 %v1177, %v1181
        %v1246 = vadd.f32 %v1178, %v1181
        %v1247 = vmax.f32 %v1183, 0.0
        %v1248 = vmax.f32 %v1184, 0.0
        %v1249 = vmax.f32 %v1185, 0.0
        %v1250 = vmax.f32 %v1186, 0.0
        %v1251 = vmax.f32 %v1187, 0.0
        %v1252 = vmax.f32 %v1188, 0.0
        %v1253 = vmax.f32 %v1189, 0.0
        %v1254 = vmax.f32 %v1190, 0.0
        %v1255 = vmax.f32 %v1191, 0.0
        %v1256 = vmax.f32 %v1192, 0.0
        %v1257 = vmax.f32 %v1193, 0.0
        %v1258 = vmax.f32 %v1194, 0.0
        %v1259 = vmax.f32 %v1195, 0.0
        %v1260 = vmax.f32 %v1196, 0.0
        %v1261 = vmax.f32 %v1197, 0.0
        %v1262 = vmax.f32 %v1198, 0.0
        %v1263 = vmax.f32 %v1199, 0.0
        %v1264 = vmax.f32 %v1200, 0.0
        %v1265 = vmax.f32 %v1201, 0.0
        %v1266 = vmax.f32 %v1202, 0.0
        %v1267 = vmax.f32 %v1203, 0.0
        %v1268 = vmax.f32 %v1204, 0.0
        %v1269 = vmax.f32 %v1205, 0.0
        %v1270 = vmax.f32 %v1206, 0.0
        %v1271 = vmax.f32 %v1207, 0.0
        %v1272 = vmax.f32 %v1208, 0.0
        %v1273 = vmax.f32 %v1209, 0.0
        %v1274 = vmax.f32 %v1210, 0.0
        %v1275 = vmax.f32 %v1211, 0.0
        %v1276 = vmax.f32 %v1212, 0.0
        %v1277 = vmax.f32 %v1213, 0.0
        %v1278 = vmax.f32 %v1214, 0.0
        %v1279 = vmax.f32 %v1215, 0.0
        %v1280 = vmax.f32 %v1216, 0.0
        %v1281 = vmax.f32 %v1217, 0.0
        %v1282 = vmax.f32 %v1218, 0.0
        %v1283 = vmax.f32 %v1219, 0.0
        %v1284 = vmax.f32 %v1220, 0.0
        %v1285 = vmax.f32 %v1221, 0.0
        %v1286 = vmax.f32 %v1222, 0.0
        %v1287 = vmax.f32 %v1223, 0.0
        %v1288 = vmax.f32 %v1224, 0.0
        %v1289 = vmax.f32 %v1225, 0.0
        %v1290 = vmax.f32 %v1226, 0.0
        %v1291 = vmax.f32 %v1227, 0.0
        %v1292 = vmax.f32 %v1228, 0.0
        %v1293 = vmax.f32 %v1229, 0.0
        %v1294 = vmax.f32 %v1230, 0.0
        %v1295 = vmax.f32 %v1231, 0.0
        %v1296 = vmax.f32 %v1232, 0.0
        %v1297 = vmax.f32 %v1233, 0.0
        %v1298 = vmax.f32 %v1234, 0.0
        %v1299 = vmax.f32 %v1235, 0.0
        %v1300 = vmax.f32 %v1236, 0.0
        %v1301 = vmax.f32 %v1237, 0.0
        %v1302 = vmax.f32 %v1238, 0.0
        %v1303 = vmax.f32 %v1239, 0.0
        %v1304 = vmax.f32 %v1240, 0.0
        %v1305 = vmax.f32 %v1241, 0.0
        %v1306 = vmax.f32 %v1242, 0.0
        %v1307 = vmax.f32 %v1243, 0.0
        %v1308 = vmax.f32 %v1244, 0.0
        %v1309 = vmax.f32 %v1245, 0.0
        %v1310 = vmax.f32 %v1246, 0.0
        %v1311 = vpack.c.bf16 %v1247, %v1247
        %v1312 = vpack.c.bf16 %v1248, %v1248
        %v1313 = vpack.c.bf16 %v1249, %v1249
        %v1314 = vpack.c.bf16 %v1250, %v1250
        %v1315 = vpack.c.bf16 %v1251, %v1251
        %v1316 = vpack.c.bf16 %v1252, %v1252
        %v1317 = vpack.c.bf16 %v1253, %v1253
        %v1318 = vpack.c.bf16 %v1254, %v1254
        %v1319 = vpack.c.bf16 %v1255, %v1255
        %v1320 = vpack.c.bf16 %v1256, %v1256
        %v1321 = vpack.c.bf16 %v1257, %v1257
        %v1322 = vpack.c.bf16 %v1258, %v1258
        %v1323 = vpack.c.bf16 %v1259, %v1259
        %v1324 = vpack.c.bf16 %v1260, %v1260
        %v1325 = vpack.c.bf16 %v1261, %v1261
        %v1326 = vpack.c.bf16 %v1262, %v1262
        %v1327 = vpack.c.bf16 %v1263, %v1263
        %v1328 = vpack.c.bf16 %v1264, %v1264
        %v1329 = vpack.c.bf16 %v1265, %v1265
        %v1330 = vpack.c.bf16 %v1266, %v1266
        %v1331 = vpack.c.bf16 %v1267, %v1267
        %v1332 = vpack.c.bf16 %v1268, %v1268
        %v1333 = vpack.c.bf16 %v1269, %v1269
        %v1334 = vpack.c.bf16 %v1270, %v1270
        %v1335 = vpack.c.bf16 %v1271, %v1271
        %v1336 = vpack.c.bf16 %v1272, %v1272
        %v1337 = vpack.c.bf16 %v1273, %v1273
        %v1338 = vpack.c.bf16 %v1274, %v1274
        %v1339 = vpack.c.bf16 %v1275, %v1275
        %v1340 = vpack.c.bf16 %v1276, %v1276
        %v1341 = vpack.c.bf16 %v1277, %v1277
        %v1342 = vpack.c.bf16 %v1278, %v1278
        %v1343 = vpack.c.bf16 %v1279, %v1279
        %v1344 = vpack.c.bf16 %v1280, %v1280
        %v1345 = vpack.c.bf16 %v1281, %v1281
        %v1346 = vpack.c.bf16 %v1282, %v1282
        %v1347 = vpack.c.bf16 %v1283, %v1283
        %v1348 = vpack.c.bf16 %v1284, %v1284
        %v1349 = vpack.c.bf16 %v1285, %v1285
        %v1350 = vpack.c.bf16 %v1286, %v1286
        %v1351 = vpack.c.bf16 %v1287, %v1287
        %v1352 = vpack.c.bf16 %v1288, %v1288
        %v1353 = vpack.c.bf16 %v1289, %v1289
        %v1354 = vpack.c.bf16 %v1290, %v1290
        %v1355 = vpack.c.bf16 %v1291, %v1291
        %v1356 = vpack.c.bf16 %v1292, %v1292
        %v1357 = vpack.c.bf16 %v1293, %v1293
        %v1358 = vpack.c.bf16 %v1294, %v1294
        %v1359 = vpack.c.bf16 %v1295, %v1295
        %v1360 = vpack.c.bf16 %v1296, %v1296
        %v1361 = vpack.c.bf16 %v1297, %v1297
        %v1362 = vpack.c.bf16 %v1298, %v1298
        %v1363 = vpack.c.bf16 %v1299, %v1299
        %v1364 = vpack.c.bf16 %v1300, %v1300
        %v1365 = vpack.c.bf16 %v1301, %v1301
        %v1366 = vpack.c.bf16 %v1302, %v1302
        %v1367 = vpack.c.bf16 %v1303, %v1303
        %v1368 = vpack.c.bf16 %v1304, %v1304
        %v1369 = vpack.c.bf16 %v1305, %v1305
        %v1370 = vpack.c.bf16 %v1306, %v1306
        %v1371 = vpack.c.bf16 %v1307, %v1307
        %v1372 = vpack.c.bf16 %v1308, %v1308
        %v1373 = vpack.c.bf16 %v1309, %v1309
        %v1374 = vpack.c.bf16 %v1310, %v1310
        %1375 = vst [vmem:[%s242] sm:$0xf] %v1311
        %1376 = vst [vmem:[%s242 + $0x4] sm:$0xf] %v1312
        %1377 = vst [vmem:[%s242 + $0x8] sm:$0xf] %v1313
        %1378 = vst [vmem:[%s242 + $0xc] sm:$0xf] %v1314
        %1379 = vst [vmem:[%s242 + $0x10] sm:$0xf] %v1315
        %1380 = vst [vmem:[%s242 + $0x14] sm:$0xf] %v1316
        %1381 = vst [vmem:[%s242 + $0x18] sm:$0xf] %v1317
        %1382 = vst [vmem:[%s242 + $0x1c] sm:$0xf] %v1318
        %1383 = vst [vmem:[%s242 + $0x20] sm:$0xf] %v1319
        %1384 = vst [vmem:[%s242 + $0x24] sm:$0xf] %v1320
        %1385 = vst [vmem:[%s242 + $0x28] sm:$0xf] %v1321
        %1386 = vst [vmem:[%s242 + $0x2c] sm:$0xf] %v1322
        %1387 = vst [vmem:[%s242 + $0x30] sm:$0xf] %v1323
        %1388 = vst [vmem:[%s242 + $0x34] sm:$0xf] %v1324
        %1389 = vst [vmem:[%s242 + $0x38] sm:$0xf] %v1325
        %1390 = vst [vmem:[%s242 + $0x3c] sm:$0xf] %v1326
        %1391 = vst [vmem:[%s242 + $0x40] sm:$0xf] %v1327
        %1392 = vst [vmem:[%s242 + $0x44] sm:$0xf] %v1328
        %1393 = vst [vmem:[%s242 + $0x48] sm:$0xf] %v1329
        %1394 = vst [vmem:[%s242 + $0x4c] sm:$0xf] %v1330
        %1395 = vst [vmem:[%s242 + $0x50] sm:$0xf] %v1331
        %1396 = vst [vmem:[%s242 + $0x54] sm:$0xf] %v1332
        %1397 = vst [vmem:[%s242 + $0x58] sm:$0xf] %v1333
        %1398 = vst [vmem:[%s242 + $0x5c] sm:$0xf] %v1334
        %1399 = vst [vmem:[%s242 + $0x60] sm:$0xf] %v1335
        %1400 = vst [vmem:[%s242 + $0x64] sm:$0xf] %v1336
        %1401 = vst [vmem:[%s242 + $0x68] sm:$0xf] %v1337
        %1402 = vst [vmem:[%s242 + $0x6c] sm:$0xf] %v1338
        %1403 = vst [vmem:[%s242 + $0x70] sm:$0xf] %v1339
        %1404 = vst [vmem:[%s242 + $0x74] sm:$0xf] %v1340
        %1405 = vst [vmem:[%s242 + $0x78] sm:$0xf] %v1341
        %1406 = vst [vmem:[%s242 + $0x7c] sm:$0xf] %v1342
        %1407 = vst [vmem:[%s242 + $0x80] sm:$0xf] %v1343
        %1408 = vst [vmem:[%s242 + $0x84] sm:$0xf] %v1344
        %1409 = vst [vmem:[%s242 + $0x88] sm:$0xf] %v1345
        %1410 = vst [vmem:[%s242 + $0x8c] sm:$0xf] %v1346
        %1411 = vst [vmem:[%s242 + $0x90] sm:$0xf] %v1347
        %1412 = vst [vmem:[%s242 + $0x94] sm:$0xf] %v1348
        %1413 = vst [vmem:[%s242 + $0x98] sm:$0xf] %v1349
        %1414 = vst [vmem:[%s242 + $0x9c] sm:$0xf] %v1350
        %1415 = vst [vmem:[%s242 + $0xa0] sm:$0xf] %v1351
        %1416 = vst [vmem:[%s242 + $0xa4] sm:$0xf] %v1352
        %1417 = vst [vmem:[%s242 + $0xa8] sm:$0xf] %v1353
        %1418 = vst [vmem:[%s242 + $0xac] sm:$0xf] %v1354
        %1419 = vst [vmem:[%s242 + $0xb0] sm:$0xf] %v1355
        %1420 = vst [vmem:[%s242 + $0xb4] sm:$0xf] %v1356
        %1421 = vst [vmem:[%s242 + $0xb8] sm:$0xf] %v1357
        %1422 = vst [vmem:[%s242 + $0xbc] sm:$0xf] %v1358
        %1423 = vst [vmem:[%s242 + $0xc0] sm:$0xf] %v1359
        %1424 = vst [vmem:[%s242 + $0xc4] sm:$0xf] %v1360
        %1425 = vst [vmem:[%s242 + $0xc8] sm:$0xf] %v1361
        %1426 = vst [vmem:[%s242 + $0xcc] sm:$0xf] %v1362
        %1427 = vst [vmem:[%s242 + $0xd0] sm:$0xf] %v1363
        %1428 = vst [vmem:[%s242 + $0xd4] sm:$0xf] %v1364
        %1429 = vst [vmem:[%s242 + $0xd8] sm:$0xf] %v1365
        %1430 = vst [vmem:[%s242 + $0xdc] sm:$0xf] %v1366
        %1431 = vst [vmem:[%s242 + $0xe0] sm:$0xf] %v1367
        %1432 = vst [vmem:[%s242 + $0xe4] sm:$0xf] %v1368
        %1433 = vst [vmem:[%s242 + $0xe8] sm:$0xf] %v1369
        %1434 = vst [vmem:[%s242 + $0xec] sm:$0xf] %v1370
        %1435 = vst [vmem:[%s242 + $0xf0] sm:$0xf] %v1371
        %1436 = vst [vmem:[%s242 + $0xf4] sm:$0xf] %v1372
        %1437 = vst [vmem:[%s242 + $0xf8] sm:$0xf] %v1373
        %1438 = vst [vmem:[%s242 + $0xfc] sm:$0xf] %v1374
        %s1439 = sand.u32 %s144, 1
        %s1440 = scalar_lea.sflag [#allocation3], %s1439
        %s1441 = sand.u32 %s144, 1
        %s1442 = smul.addr %s1441, 256
        %s1443 = scalar_lea.vmem [#allocation2], %s1442
        // Predicated region
        $region37: #{fused_matmul.1} parent=35 // pred_check
          %p1444 = pneg %p154
        $region38: #{fused_matmul.1} parent=35 // pred_check_branch
          %1446 = sbr.rel (%p1444) target = $region40
        $region39: #{fused_matmul.1} parent=35 // pred_region
          %s1447 = smul.u32 64, %s22
          %1449 = vsyncadd %s1440, 0
          %s1450 = sadd.s32 %s23, %s1447
          %s1451 = smul.addr %s1450, 4
          %s1452 = scalar_lea.hbm %s4, %s1451
          %s1453 = sshll.u32 %s1443, 4
          %s1454 = int_to_ptr.vmem [resolvable:$true] %s1453
          %s1455 = sshll.u32 %s1452, 4
          %s1456 = int_to_ptr.hbm [resolvable:$true] %s1455
          %1461 = dma.vmem_to_hbm [thread:$0]  %s1454, 4096, %s1456, %s1440, 64, 64, 4
        $region40: #{fused_matmul.1} parent=35 // pred_fallthru
          _
      $region36: #{fused_matmul.1} parent=5 // pred_fallthru
        _
      %p1462 = scmp.le.s32.totalorder 2, %s13
      // Predicated region
      $region41: #{fused_matmul.1} parent=5 // pred_check
        %p1463 = pneg %p1462
      $region42: #{fused_matmul.1} parent=5 // pred_check_branch
        %1465 = sbr.rel (%p1463) target = $region44
      $region43: #{fused_matmul.1} parent=5 // pred_region
        %s1466 = ssub.s32 %s13, 2
        // Predicated region
        $region45: #{fused_matmul.1} parent=43 // pred_check
          %p1467 = pneg %p160
        $region46: #{fused_matmul.1} parent=43 // pred_check_branch
          %1469 = sbr.rel (%p1467) target = $region48
        $region47: #{fused_matmul.1} parent=43 // pred_region
          %s1470 = sand.u32 %s145, 1
          %s1471 = scalar_lea.sflag [#allocation3], %s1470
          %s1472 = sand.u32 %s145, 1
          %s1473 = smul.addr %s1472, 256
          %s1474 = scalar_lea.vmem [#allocation2], %s1473
          %1476 = dma.done %s1471, 4096
        $region48: #{fused_matmul.1} parent=43 // pred_fallthru
          _
      $region44: #{fused_matmul.1} parent=5 // pred_fallthru
        _
    $region6: #{fused_matmul.1} parent=1 // loop_footer
      %s17 = sadd.s32 1, %s13
    $region7: #{fused_matmul.1} parent=1 // loop_footer_branch
      %12 = sbr.rel target = $region3
    $region8: #{fused_matmul.1} parent=1 // loop_exit
      _
    %1477 = vsyncpa [#allocation3], 1
    %s1478 = scalar_lea.sflag [#allocation3], 1
    %1479 = vsyncpa %s1478, 1

</llo_original>
